<compile_context>
chip_gen: v6e
topology: v6e:2x2x1
jax: 0.10.0
libtpu: 0.0.40
codegen_flags: <defaults>
</compile_context>

<pallas_src>
import functools
import math

import jax
import jax.numpy as jnp
from jax.experimental import pallas as pl
from jax.experimental.pallas import tpu as pltpu


# ------------------------------ helpers -------------------------------------


def _full(shape):
    """Full-array BlockSpec (block == array, grid=(1,)); works with scalar prefetch too."""
    return pl.BlockSpec(shape, lambda *_: (0,) * len(shape))


def _mxu_dot(a, b):
    # bf16 operands at MXU-native precision, f32 accumulation.
    return jnp.dot(a.astype(jnp.bfloat16), b.astype(jnp.bfloat16),
                   preferred_element_type=jnp.float32)


def _layernorm(x, g, b, eps):
    mean = jnp.mean(x, axis=-1, keepdims=True)
    var = jnp.mean(jnp.square(x - mean), axis=-1, keepdims=True)
    return (x - mean) * jax.lax.rsqrt(var + eps) * g + b


# -------------------------- fused encoder kernel -----------------------------


def _encoder_kernel(emb_ref, mask_ref, wqkv_ref, bqkv_ref, wo_ref, bo_ref,
                    w1_ref, b1_ref, w2_ref, b2_ref, ln_g_ref, ln_b_ref,
                    o_ref, ctx_ref, *, B, S, num_heads, head_dim, eps):
    H = num_heads * head_dim

    # --- embedding layernorm (no zero-residual tensor materialized) ---
    x = _layernorm(emb_ref[...], ln_g_ref[0:1, :], ln_b_ref[0:1, :], eps)

    # --- fused QKV projection; 1/sqrt(dh) is pre-folded into the Q weights ---
    qkv = _mxu_dot(x, wqkv_ref[...]) + bqkv_ref[...]            # [M, 3H]
    q = qkv[:, 0:H]
    k = qkv[:, H:2 * H]
    v = qkv[:, 2 * H:3 * H]

    mask = mask_ref[...]                                        # [B, S] additive

    # --- attention: per-(batch, head), statically unrolled (B*num_heads tiny) ---
    for b in range(B):
        r0, r1 = b * S, (b + 1) * S
        m_b = mask[b:b + 1, :]                                  # [1, S] bcast over queries
        q_b, k_b, v_b = q[r0:r1, :], k[r0:r1, :], v[r0:r1, :]   # [S, H]
        for h in range(num_heads):
            c0, c1 = h * head_dim, (h + 1) * head_dim
            s = _mxu_dot(q_b[:, c0:c1], k_b[:, c0:c1].T) + m_b  # [S, S]
            p = jax.nn.softmax(s, axis=-1)
            ctx_ref[r0:r1, c0:c1] = _mxu_dot(p, v_b[:, c0:c1])  # [S, dh]

    # --- output projection + residual layernorm ---
    attn = _mxu_dot(ctx_ref[...], wo_ref[...]) + bo_ref[...]
    x = _layernorm(attn + x, ln_g_ref[1:2, :], ln_b_ref[1:2, :], eps)

    # --- feed-forward + residual layernorm ---
    # TODO(synk): torch.nn.GELU defaults to the exact erf form; tanh approximation
    # kept here for guaranteed Mosaic lowering (tiny numerical difference).
    ffn = jax.nn.gelu(_mxu_dot(x, w1_ref[...]) + b1_ref[...], approximate=True)
    ffn = _mxu_dot(ffn, w2_ref[...]) + b2_ref[...]
    x = _layernorm(ffn + x, ln_g_ref[2:3, :], ln_b_ref[2:3, :], eps)

    o_ref[...] = x.astype(o_ref.dtype)


def encoder_layer(emb, add_mask, params, *, B, S, num_heads, eps=1e-12):
    """Embedding-LN + one fused BERT encoder layer, single pallas_call."""
    M, H = emb.shape
    dh = H // num_heads
    I = params["w1"].shape[1]
    scale = 1.0 / math.sqrt(dh)

    # Fold the attention scale into the Q projection; fuse q/k/v into one matmul.
    wqkv = jnp.concatenate(
        [params["wq"] * scale, params["wk"], params["wv"]], axis=1)       # [H, 3H]
    bqkv = jnp.concatenate(
        [params["bq"] * scale, params["bk"], params["bv"]]).reshape(1, 3 * H)
    ln_g = jnp.stack([params["emb_ln_g"], params["attn_ln_g"], params["ffn_ln_g"]])
    ln_b = jnp.stack([params["emb_ln_b"], params["attn_ln_b"], params["ffn_ln_b"]])

    return pl.pallas_call(
        functools.partial(_encoder_kernel, B=B, S=S, num_heads=num_heads,
                          head_dim=dh, eps=eps),
        out_shape=jax.ShapeDtypeStruct((M, H), jnp.float32),
        grid=(1,),
        in_specs=[
            _full((M, H)),            # embeddings
            _full((B, S)),            # additive mask (not repeated per head)
            _full((H, 3 * H)), _full((1, 3 * H)),
            _full((H, H)), _full((1, H)),
            _full((H, I)), _full((1, I)),
            _full((I, H)), _full((1, H)),
            _full((3, H)), _full((3, H)),
        ],
        out_specs=_full((M, H)),
        scratch_shapes=[pltpu.VMEM((M, H), jnp.float32)],   # attention context
    )(emb, add_mask, wqkv, bqkv,
      params["wo"], params["bo"].reshape(1, H),
      params["w1"], params["b1"].reshape(1, I),
      params["w2"], params["b2"].reshape(1, H),
      ln_g, ln_b)


# --------------------- fused pooler + dropout + classifier -------------------


def _head_kernel(cls_ref, pw_ref, pb_ref, cw_ref, cb_ref, o_ref):
    pooled = jnp.tanh(_mxu_dot(cls_ref[...], pw_ref[...]) + pb_ref[...])
    # nn.Dropout in eval mode is identity.
    o_ref[...] = (_mxu_dot(pooled, cw_ref[...]) + cb_ref[...]).astype(o_ref.dtype)


def _head_kernel_train(seed_ref, cls_ref, pw_ref, pb_ref, cw_ref, cb_ref, o_ref,
                       *, dr_rate):
    pooled = jnp.tanh(_mxu_dot(cls_ref[...], pw_ref[...]) + pb_ref[...])
    # Inverted dropout via the TPU hardware PRNG.
    # TODO(synk): semantics match nn.Dropout but not torch's exact RNG stream.
    pltpu.prng_seed(seed_ref[0])
    bits = pltpu.bitcast(pltpu.prng_random_bits(pooled.shape), jnp.uint32)
    u = (bits >> jnp.uint32(8)).astype(jnp.float32) * (1.0 / (1 << 24))
    keep = (u >= dr_rate).astype(jnp.float32)
    pooled = pooled * keep * (1.0 / (1.0 - dr_rate))
    o_ref[...] = (_mxu_dot(pooled, cw_ref[...]) + cb_ref[...]).astype(o_ref.dtype)


def pooler_classifier(cls_tok, pool_w, pool_b, cls_w, cls_b, *,
                      dr_rate=0.5, train=False, seed=0):
    """tanh(cls @ pool_w + pool_b) -> dropout -> @ cls_w + cls_b, one fused kernel."""
    Bm, H = cls_tok.shape
    C = cls_w.shape[1]
    # Lane-dense classifier output: pad num_classes up to 128 lanes, slice after.
    Np = pl.cdiv(C, 128) * 128
    cls_w_p = jnp.zeros((H, Np), jnp.float32).at[:, :C].set(cls_w)
    cls_b_p = jnp.zeros((1, Np), jnp.float32).at[0, :C].set(cls_b)

    args = (cls_tok, pool_w, pool_b.reshape(1, H), cls_w_p, cls_b_p)
    in_specs = [_full((Bm, H)), _full((H, H)), _full((1, H)),
                _full((H, Np)), _full((1, Np))]
    out_spec = _full((Bm, Np))
    out_shape = jax.ShapeDtypeStruct((Bm, Np), jnp.float32)

    if train and dr_rate > 0.0:
        out = pl.pallas_call(
            functools.partial(_head_kernel_train, dr_rate=dr_rate),
            out_shape=out_shape,
            grid_spec=pltpu.PrefetchScalarGridSpec(
                num_scalar_prefetch=1, grid=(1,),
                in_specs=in_specs, out_specs=out_spec),
        )(jnp.array([seed], jnp.int32), *args)
    else:
        # Eval: no seed / scalar-prefetch plumbing at all.
        out = pl.pallas_call(
            _head_kernel, out_shape=out_shape, grid=(1,),
            in_specs=in_specs, out_specs=out_spec,
        )(*args)
    return out[:, :C]


# --------------------------- parameters / forward ----------------------------


def init_params(key, vocab=100, max_pos=32, H=32, num_heads=4, I=64, num_classes=7):
    ks = jax.random.split(key, 16)
    n = lambda k, shape: (0.02 * jax.random.normal(k, shape)).astype(jnp.float32)
    return {
        "word_emb": n(ks[0], (vocab, H)),
        "pos_emb": n(ks[1], (max_pos, H)),
        "type_emb": n(ks[2], (2, H)),
        "emb_ln_g": jnp.ones((H,), jnp.float32),
        "emb_ln_b": jnp.zeros((H,), jnp.float32),
        "wq": n(ks[3], (H, H)), "bq": jnp.zeros((H,), jnp.float32),
        "wk": n(ks[4], (H, H)), "bk": jnp.zeros((H,), jnp.float32),
        "wv": n(ks[5], (H, H)), "bv": jnp.zeros((H,), jnp.float32),
        "wo": n(ks[6], (H, H)), "bo": jnp.zeros((H,), jnp.float32),
        "attn_ln_g": jnp.ones((H,), jnp.float32),
        "attn_ln_b": jnp.zeros((H,), jnp.float32),
        "w1": n(ks[7], (H, I)), "b1": jnp.zeros((I,), jnp.float32),
        "w2": n(ks[8], (I, H)), "b2": jnp.zeros((H,), jnp.float32),
        "ffn_ln_g": jnp.ones((H,), jnp.float32),
        "ffn_ln_b": jnp.zeros((H,), jnp.float32),
        "pool_w": n(ks[9], (H, H)), "pool_b": jnp.zeros((H,), jnp.float32),
        "cls_w": n(ks[10], (H, num_classes)),
        "cls_b": jnp.zeros((num_classes,), jnp.float32),
    }


def bert_classifier_forward(params, input_ids, attention_mask, token_type_ids,
                            num_heads=4, dr_rate=0.5, train=False, seed=0):
    B, S = input_ids.shape
    H = params["word_emb"].shape[1]

    # --- embeddings (gathers are glue in plain JAX) ---
    emb = (params["word_emb"][input_ids]
           + params["pos_emb"][:S][None, :, :]
           + params["type_emb"][token_type_ids]).astype(jnp.float32)
    emb = emb.reshape(B * S, H)

    add_mask = (1.0 - attention_mask.astype(jnp.float32)) * -1e9      # [B, S]

    # --- fused embedding-LN + encoder layer (one pallas_call) ---
    x = encoder_layer(emb, add_mask, params, B=B, S=S, num_heads=num_heads)

    # --- pooler + dropout + classifier (one pallas_call) ---
    cls_tok = x.reshape(B, S, H)[:, 0, :]                              # [B, H]
    logits = pooler_classifier(cls_tok, params["pool_w"], params["pool_b"],
                               params["cls_w"], params["cls_b"],
                               dr_rate=dr_rate, train=train, seed=seed)
    return logits


# ---------------------------------- main -------------------------------------


if __name__ == "__main__":
    B, S, H, NH, I, VOCAB, C = 2, 8, 32, 4, 64, 100, 7

    key = jax.random.PRNGKey(0)
    k_par, k_ids, k_tt = jax.random.split(key, 3)

    params = init_params(k_par, vocab=VOCAB, max_pos=32, H=H,
                         num_heads=NH, I=I, num_classes=C)

    input_ids = jax.random.randint(k_ids, (B, S), 0, VOCAB, dtype=jnp.int32)
    # batch 1 has two padding tokens at the end
    attention_mask = jnp.array([[1] * S, [1] * (S - 2) + [0, 0]], dtype=jnp.int32)
    token_type_ids = jnp.zeros((B, S), dtype=jnp.int32)

    logits = bert_classifier_forward(params, input_ids, attention_mask,
                                     token_type_ids, num_heads=NH,
                                     dr_rate=0.5, train=False, seed=0)
    logits = jax.block_until_ready(logits)

    assert logits.shape == (B, C), logits.shape
    assert bool(jnp.all(jnp.isfinite(logits)))
    print("KERNEL_OK")
</pallas_src>

<mosaic_0001>
module attributes {stable_mosaic.version = 11 : i64} {
  func.func @_encoder_kernel(%arg0: i32, %arg1: memref<16x32xf32, #tpu.memory_space<vmem>>, %arg2: memref<2x8xf32, #tpu.memory_space<vmem>>, %arg3: memref<32x96xf32, #tpu.memory_space<vmem>>, %arg4: memref<1x96xf32, #tpu.memory_space<vmem>>, %arg5: memref<32x32xf32, #tpu.memory_space<vmem>>, %arg6: memref<1x32xf32, #tpu.memory_space<vmem>>, %arg7: memref<32x64xf32, #tpu.memory_space<vmem>>, %arg8: memref<1x64xf32, #tpu.memory_space<vmem>>, %arg9: memref<64x32xf32, #tpu.memory_space<vmem>>, %arg10: memref<1x32xf32, #tpu.memory_space<vmem>>, %arg11: memref<3x32xf32, #tpu.memory_space<vmem>>, %arg12: memref<3x32xf32, #tpu.memory_space<vmem>>, %arg13: memref<16x32xf32, #tpu.memory_space<vmem>>, %arg14: memref<16x32xf32, #tpu.memory_space<vmem>>) attributes {dimension_semantics = [#tpu.dimension_semantics<arbitrary>], iteration_bounds = array<i64: 1>, scalar_prefetch = 0 : i64, scratch_operands = 1 : i64, tpu.core_type = #tpu.core_type<tc>, window_params = [{pipeline_mode = #tpu.pipeline_mode<synchronous>, transform_indices = @transform_0, window_bounds = array<i64: 16, 32>}, {pipeline_mode = #tpu.pipeline_mode<synchronous>, transform_indices = @transform_1, window_bounds = array<i64: 2, 8>}, {pipeline_mode = #tpu.pipeline_mode<synchronous>, transform_indices = @transform_2, window_bounds = array<i64: 32, 96>}, {pipeline_mode = #tpu.pipeline_mode<synchronous>, transform_indices = @transform_3, window_bounds = array<i64: 1, 96>}, {pipeline_mode = #tpu.pipeline_mode<synchronous>, transform_indices = @transform_4, window_bounds = array<i64: 32, 32>}, {pipeline_mode = #tpu.pipeline_mode<synchronous>, transform_indices = @transform_5, window_bounds = array<i64: 1, 32>}, {pipeline_mode = #tpu.pipeline_mode<synchronous>, transform_indices = @transform_6, window_bounds = array<i64: 32, 64>}, {pipeline_mode = #tpu.pipeline_mode<synchronous>, transform_indices = @transform_7, window_bounds = array<i64: 1, 64>}, {pipeline_mode = #tpu.pipeline_mode<synchronous>, transform_indices = @transform_8, window_bounds = array<i64: 64, 32>}, {pipeline_mode = #tpu.pipeline_mode<synchronous>, transform_indices = @transform_9, window_bounds = array<i64: 1, 32>}, {pipeline_mode = #tpu.pipeline_mode<synchronous>, transform_indices = @transform_10, window_bounds = array<i64: 3, 32>}, {pipeline_mode = #tpu.pipeline_mode<synchronous>, transform_indices = @transform_11, window_bounds = array<i64: 3, 32>}, {pipeline_mode = #tpu.pipeline_mode<synchronous>, transform_indices = @transform_12, window_bounds = array<i64: 16, 32>}]} {
    %c0 = arith.constant 0 : index
    %c0_0 = arith.constant 0 : index
    %0 = vector.load %arg1[%c0, %c0_0] : memref<16x32xf32, #tpu.memory_space<vmem>>, vector<16x32xf32>
    %c0_1 = arith.constant 0 : index
    %c0_2 = arith.constant 0 : index
    %1 = vector.load %arg11[%c0_1, %c0_2] : memref<3x32xf32, #tpu.memory_space<vmem>>, vector<1x32xf32>
    %c0_3 = arith.constant 0 : index
    %c0_4 = arith.constant 0 : index
    %2 = vector.load %arg12[%c0_3, %c0_4] : memref<3x32xf32, #tpu.memory_space<vmem>>, vector<1x32xf32>
    %cst = arith.constant dense<0.000000e+00> : vector<16xf32>
    %3 = vector.multi_reduction <add>, %0, %cst [1] : vector<16x32xf32> to vector<16xf32>
    %4 = vector.shape_cast %3 : vector<16xf32> to vector<16x1xf32>
    %cst_5 = arith.constant 3.200000e+01 : f32
    %5 = vector.broadcast %cst_5 : f32 to vector<16x1xf32>
    %6 = arith.divf %4, %5 : vector<16x1xf32>
    %7 = vector.broadcast %6 : vector<16x1xf32> to vector<16x32xf32>
    %8 = arith.subf %0, %7 : vector<16x32xf32>
    %9 = arith.mulf %8, %8 : vector<16x32xf32>
    %cst_6 = arith.constant dense<0.000000e+00> : vector<16xf32>
    %10 = vector.multi_reduction <add>, %9, %cst_6 [1] : vector<16x32xf32> to vector<16xf32>
    %11 = vector.shape_cast %10 : vector<16xf32> to vector<16x1xf32>
    %cst_7 = arith.constant 3.200000e+01 : f32
    %12 = vector.broadcast %cst_7 : f32 to vector<16x1xf32>
    %13 = arith.divf %11, %12 : vector<16x1xf32>
    %14 = vector.broadcast %6 : vector<16x1xf32> to vector<16x32xf32>
    %15 = arith.subf %0, %14 : vector<16x32xf32>
    %cst_8 = arith.constant 9.99999996E-13 : f32
    %16 = vector.broadcast %cst_8 : f32 to vector<16x1xf32>
    %17 = arith.addf %13, %16 : vector<16x1xf32>
    %18 = math.rsqrt %17 : vector<16x1xf32>
    %19 = vector.broadcast %18 : vector<16x1xf32> to vector<16x32xf32>
    %20 = arith.mulf %15, %19 : vector<16x32xf32>
    %21 = vector.broadcast %1 : vector<1x32xf32> to vector<16x32xf32>
    %22 = arith.mulf %20, %21 : vector<16x32xf32>
    %23 = vector.broadcast %2 : vector<1x32xf32> to vector<16x32xf32>
    %24 = arith.addf %22, %23 : vector<16x32xf32>
    %c0_9 = arith.constant 0 : index
    %c0_10 = arith.constant 0 : index
    %25 = vector.load %arg3[%c0_9, %c0_10] : memref<32x96xf32, #tpu.memory_space<vmem>>, vector<32x96xf32>
    %26 = arith.truncf %24 : vector<16x32xf32> to vector<16x32xbf16>
    %27 = arith.truncf %25 : vector<32x96xf32> to vector<32x96xbf16>
    %cst_11 = arith.constant dense<0.000000e+00> : vector<16x96xf32>
    %28 = tpu.matmul %26, %27, %cst_11 {dimension_numbers = #tpu.dot_dimension_numbers<[1], [0], [0], [1], [0, 0, 1, 1], [], []>} : vector<16x32xbf16>, vector<32x96xbf16>, vector<16x96xf32> -> vector<16x96xf32>
    %c0_12 = arith.constant 0 : index
    %c0_13 = arith.constant 0 : index
    %29 = vector.load %arg4[%c0_12, %c0_13] : memref<1x96xf32, #tpu.memory_space<vmem>>, vector<1x96xf32>
    %30 = vector.broadcast %29 : vector<1x96xf32> to vector<16x96xf32>
    %31 = arith.addf %28, %30 : vector<16x96xf32>
    %32 = vector.extract_strided_slice %31 {offsets = [0, 0], sizes = [16, 32], strides = [1, 1]} : vector<16x96xf32> to vector<16x32xf32>
    %33 = vector.extract_strided_slice %31 {offsets = [0, 32], sizes = [16, 32], strides = [1, 1]} : vector<16x96xf32> to vector<16x32xf32>
    %34 = vector.extract_strided_slice %31 {offsets = [0, 64], sizes = [16, 32], strides = [1, 1]} : vector<16x96xf32> to vector<16x32xf32>
    %c0_14 = arith.constant 0 : index
    %c0_15 = arith.constant 0 : index
    %35 = vector.load %arg2[%c0_14, %c0_15] : memref<2x8xf32, #tpu.memory_space<vmem>>, vector<2x8xf32>
    %36 = vector.extract_strided_slice %35 {offsets = [0, 0], sizes = [1, 8], strides = [1, 1]} : vector<2x8xf32> to vector<1x8xf32>
    %37 = vector.extract_strided_slice %32 {offsets = [0, 0], sizes = [8, 32], strides = [1, 1]} : vector<16x32xf32> to vector<8x32xf32>
    %38 = vector.extract_strided_slice %33 {offsets = [0, 0], sizes = [8, 32], strides = [1, 1]} : vector<16x32xf32> to vector<8x32xf32>
    %39 = vector.extract_strided_slice %34 {offsets = [0, 0], sizes = [8, 32], strides = [1, 1]} : vector<16x32xf32> to vector<8x32xf32>
    %40 = vector.extract_strided_slice %37 {offsets = [0, 0], sizes = [8, 8], strides = [1, 1]} : vector<8x32xf32> to vector<8x8xf32>
    %41 = vector.extract_strided_slice %38 {offsets = [0, 0], sizes = [8, 8], strides = [1, 1]} : vector<8x32xf32> to vector<8x8xf32>
    %42 = tpu.transpose %41, [1, 0] : vector<8x8xf32> -> vector<8x8xf32>
    %43 = arith.truncf %40 : vector<8x8xf32> to vector<8x8xbf16>
    %44 = arith.truncf %42 : vector<8x8xf32> to vector<8x8xbf16>
    %cst_16 = arith.constant dense<0.000000e+00> : vector<8x8xf32>
    %45 = tpu.matmul %43, %44, %cst_16 {dimension_numbers = #tpu.dot_dimension_numbers<[1], [0], [0], [1], [0, 0, 1, 1], [], []>} : vector<8x8xbf16>, vector<8x8xbf16>, vector<8x8xf32> -> vector<8x8xf32>
    %46 = vector.broadcast %36 : vector<1x8xf32> to vector<8x8xf32>
    %47 = arith.addf %45, %46 : vector<8x8xf32>
    %cst_17 = arith.constant dense<0xFF800000> : vector<8xf32>
    %48 = vector.multi_reduction <maximumf>, %47, %cst_17 [1] : vector<8x8xf32> to vector<8xf32>
    %cst_18 = arith.constant 0xFF800000 : f32
    %49 = vector.broadcast %cst_18 : f32 to vector<8xf32>
    %50 = arith.maximumf %49, %48 : vector<8xf32>
    %51 = vector.shape_cast %50 : vector<8xf32> to vector<8x1xf32>
    %52 = vector.broadcast %51 : vector<8x1xf32> to vector<8x8xf32>
    %53 = arith.subf %47, %52 : vector<8x8xf32>
    %54 = math.exp %53 : vector<8x8xf32>
    %cst_19 = arith.constant dense<0.000000e+00> : vector<8xf32>
    %55 = vector.multi_reduction <add>, %54, %cst_19 [1] : vector<8x8xf32> to vector<8xf32>
    %56 = vector.shape_cast %55 : vector<8xf32> to vector<8x1xf32>
    %57 = vector.broadcast %56 : vector<8x1xf32> to vector<8x8xf32>
    %58 = arith.divf %54, %57 : vector<8x8xf32>
    %59 = vector.extract_strided_slice %39 {offsets = [0, 0], sizes = [8, 8], strides = [1, 1]} : vector<8x32xf32> to vector<8x8xf32>
    %60 = arith.truncf %58 : vector<8x8xf32> to vector<8x8xbf16>
    %61 = arith.truncf %59 : vector<8x8xf32> to vector<8x8xbf16>
    %cst_20 = arith.constant dense<0.000000e+00> : vector<8x8xf32>
    %62 = tpu.matmul %60, %61, %cst_20 {dimension_numbers = #tpu.dot_dimension_numbers<[1], [0], [0], [1], [0, 0, 1, 1], [], []>} : vector<8x8xbf16>, vector<8x8xbf16>, vector<8x8xf32> -> vector<8x8xf32>
    %c0_21 = arith.constant 0 : index
    %c0_22 = arith.constant 0 : index
    %63 = vector.load %arg14[%c0_21, %c0_22] : memref<16x32xf32, #tpu.memory_space<vmem>>, vector<8x8xf32>
    tpu.vector_store %arg14[%c0_21, %c0_22], %62 {strides = array<i32>} : memref<16x32xf32, #tpu.memory_space<vmem>>, vector<8x8xf32>,
    %64 = vector.extract_strided_slice %37 {offsets = [0, 8], sizes = [8, 8], strides = [1, 1]} : vector<8x32xf32> to vector<8x8xf32>
    %65 = vector.extract_strided_slice %38 {offsets = [0, 8], sizes = [8, 8], strides = [1, 1]} : vector<8x32xf32> to vector<8x8xf32>
    %66 = tpu.transpose %65, [1, 0] : vector<8x8xf32> -> vector<8x8xf32>
    %67 = arith.truncf %64 : vector<8x8xf32> to vector<8x8xbf16>
    %68 = arith.truncf %66 : vector<8x8xf32> to vector<8x8xbf16>
    %cst_23 = arith.constant dense<0.000000e+00> : vector<8x8xf32>
    %69 = tpu.matmul %67, %68, %cst_23 {dimension_numbers = #tpu.dot_dimension_numbers<[1], [0], [0], [1], [0, 0, 1, 1], [], []>} : vector<8x8xbf16>, vector<8x8xbf16>, vector<8x8xf32> -> vector<8x8xf32>
    %70 = vector.broadcast %36 : vector<1x8xf32> to vector<8x8xf32>
    %71 = arith.addf %69, %70 : vector<8x8xf32>
    %cst_24 = arith.constant dense<0xFF800000> : vector<8xf32>
    %72 = vector.multi_reduction <maximumf>, %71, %cst_24 [1] : vector<8x8xf32> to vector<8xf32>
    %cst_25 = arith.constant 0xFF800000 : f32
    %73 = vector.broadcast %cst_25 : f32 to vector<8xf32>
    %74 = arith.maximumf %73, %72 : vector<8xf32>
    %75 = vector.shape_cast %74 : vector<8xf32> to vector<8x1xf32>
    %76 = vector.broadcast %75 : vector<8x1xf32> to vector<8x8xf32>
    %77 = arith.subf %71, %76 : vector<8x8xf32>
    %78 = math.exp %77 : vector<8x8xf32>
    %cst_26 = arith.constant dense<0.000000e+00> : vector<8xf32>
    %79 = vector.multi_reduction <add>, %78, %cst_26 [1] : vector<8x8xf32> to vector<8xf32>
    %80 = vector.shape_cast %79 : vector<8xf32> to vector<8x1xf32>
    %81 = vector.broadcast %80 : vector<8x1xf32> to vector<8x8xf32>
    %82 = arith.divf %78, %81 : vector<8x8xf32>
    %83 = vector.extract_strided_slice %39 {offsets = [0, 8], sizes = [8, 8], strides = [1, 1]} : vector<8x32xf32> to vector<8x8xf32>
    %84 = arith.truncf %82 : vector<8x8xf32> to vector<8x8xbf16>
    %85 = arith.truncf %83 : vector<8x8xf32> to vector<8x8xbf16>
    %cst_27 = arith.constant dense<0.000000e+00> : vector<8x8xf32>
    %86 = tpu.matmul %84, %85, %cst_27 {dimension_numbers = #tpu.dot_dimension_numbers<[1], [0], [0], [1], [0, 0, 1, 1], [], []>} : vector<8x8xbf16>, vector<8x8xbf16>, vector<8x8xf32> -> vector<8x8xf32>
    %c0_28 = arith.constant 0 : index
    %c8 = arith.constant 8 : index
    %87 = vector.load %arg14[%c0_28, %c8] : memref<16x32xf32, #tpu.memory_space<vmem>>, vector<8x8xf32>
    tpu.vector_store %arg14[%c0_28, %c8], %86 {strides = array<i32>} : memref<16x32xf32, #tpu.memory_space<vmem>>, vector<8x8xf32>,
    %88 = vector.extract_strided_slice %37 {offsets = [0, 16], sizes = [8, 8], strides = [1, 1]} : vector<8x32xf32> to vector<8x8xf32>
    %89 = vector.extract_strided_slice %38 {offsets = [0, 16], sizes = [8, 8], strides = [1, 1]} : vector<8x32xf32> to vector<8x8xf32>
    %90 = tpu.transpose %89, [1, 0] : vector<8x8xf32> -> vector<8x8xf32>
    %91 = arith.truncf %88 : vector<8x8xf32> to vector<8x8xbf16>
    %92 = arith.truncf %90 : vector<8x8xf32> to vector<8x8xbf16>
    %cst_29 = arith.constant dense<0.000000e+00> : vector<8x8xf32>
    %93 = tpu.matmul %91, %92, %cst_29 {dimension_numbers = #tpu.dot_dimension_numbers<[1], [0], [0], [1], [0, 0, 1, 1], [], []>} : vector<8x8xbf16>, vector<8x8xbf16>, vector<8x8xf32> -> vector<8x8xf32>
    %94 = vector.broadcast %36 : vector<1x8xf32> to vector<8x8xf32>
    %95 = arith.addf %93, %94 : vector<8x8xf32>
    %cst_30 = arith.constant dense<0xFF800000> : vector<8xf32>
    %96 = vector.multi_reduction <maximumf>, %95, %cst_30 [1] : vector<8x8xf32> to vector<8xf32>
    %cst_31 = arith.constant 0xFF800000 : f32
    %97 = vector.broadcast %cst_31 : f32 to vector<8xf32>
    %98 = arith.maximumf %97, %96 : vector<8xf32>
    %99 = vector.shape_cast %98 : vector<8xf32> to vector<8x1xf32>
    %100 = vector.broadcast %99 : vector<8x1xf32> to vector<8x8xf32>
    %101 = arith.subf %95, %100 : vector<8x8xf32>
    %102 = math.exp %101 : vector<8x8xf32>
    %cst_32 = arith.constant dense<0.000000e+00> : vector<8xf32>
    %103 = vector.multi_reduction <add>, %102, %cst_32 [1] : vector<8x8xf32> to vector<8xf32>
    %104 = vector.shape_cast %103 : vector<8xf32> to vector<8x1xf32>
    %105 = vector.broadcast %104 : vector<8x1xf32> to vector<8x8xf32>
    %106 = arith.divf %102, %105 : vector<8x8xf32>
    %107 = vector.extract_strided_slice %39 {offsets = [0, 16], sizes = [8, 8], strides = [1, 1]} : vector<8x32xf32> to vector<8x8xf32>
    %108 = arith.truncf %106 : vector<8x8xf32> to vector<8x8xbf16>
    %109 = arith.truncf %107 : vector<8x8xf32> to vector<8x8xbf16>
    %cst_33 = arith.constant dense<0.000000e+00> : vector<8x8xf32>
    %110 = tpu.matmul %108, %109, %cst_33 {dimension_numbers = #tpu.dot_dimension_numbers<[1], [0], [0], [1], [0, 0, 1, 1], [], []>} : vector<8x8xbf16>, vector<8x8xbf16>, vector<8x8xf32> -> vector<8x8xf32>
    %c0_34 = arith.constant 0 : index
    %c16 = arith.constant 16 : index
    %111 = vector.load %arg14[%c0_34, %c16] : memref<16x32xf32, #tpu.memory_space<vmem>>, vector<8x8xf32>
    tpu.vector_store %arg14[%c0_34, %c16], %110 {strides = array<i32>} : memref<16x32xf32, #tpu.memory_space<vmem>>, vector<8x8xf32>,
    %112 = vector.extract_strided_slice %37 {offsets = [0, 24], sizes = [8, 8], strides = [1, 1]} : vector<8x32xf32> to vector<8x8xf32>
    %113 = vector.extract_strided_slice %38 {offsets = [0, 24], sizes = [8, 8], strides = [1, 1]} : vector<8x32xf32> to vector<8x8xf32>
    %114 = tpu.transpose %113, [1, 0] : vector<8x8xf32> -> vector<8x8xf32>
    %115 = arith.truncf %112 : vector<8x8xf32> to vector<8x8xbf16>
    %116 = arith.truncf %114 : vector<8x8xf32> to vector<8x8xbf16>
    %cst_35 = arith.constant dense<0.000000e+00> : vector<8x8xf32>
    %117 = tpu.matmul %115, %116, %cst_35 {dimension_numbers = #tpu.dot_dimension_numbers<[1], [0], [0], [1], [0, 0, 1, 1], [], []>} : vector<8x8xbf16>, vector<8x8xbf16>, vector<8x8xf32> -> vector<8x8xf32>
    %118 = vector.broadcast %36 : vector<1x8xf32> to vector<8x8xf32>
    %119 = arith.addf %117, %118 : vector<8x8xf32>
    %cst_36 = arith.constant dense<0xFF800000> : vector<8xf32>
    %120 = vector.multi_reduction <maximumf>, %119, %cst_36 [1] : vector<8x8xf32> to vector<8xf32>
    %cst_37 = arith.constant 0xFF800000 : f32
    %121 = vector.broadcast %cst_37 : f32 to vector<8xf32>
    %122 = arith.maximumf %121, %120 : vector<8xf32>
    %123 = vector.shape_cast %122 : vector<8xf32> to vector<8x1xf32>
    %124 = vector.broadcast %123 : vector<8x1xf32> to vector<8x8xf32>
    %125 = arith.subf %119, %124 : vector<8x8xf32>
    %126 = math.exp %125 : vector<8x8xf32>
    %cst_38 = arith.constant dense<0.000000e+00> : vector<8xf32>
    %127 = vector.multi_reduction <add>, %126, %cst_38 [1] : vector<8x8xf32> to vector<8xf32>
    %128 = vector.shape_cast %127 : vector<8xf32> to vector<8x1xf32>
    %129 = vector.broadcast %128 : vector<8x1xf32> to vector<8x8xf32>
    %130 = arith.divf %126, %129 : vector<8x8xf32>
    %131 = vector.extract_strided_slice %39 {offsets = [0, 24], sizes = [8, 8], strides = [1, 1]} : vector<8x32xf32> to vector<8x8xf32>
    %132 = arith.truncf %130 : vector<8x8xf32> to vector<8x8xbf16>
    %133 = arith.truncf %131 : vector<8x8xf32> to vector<8x8xbf16>
    %cst_39 = arith.constant dense<0.000000e+00> : vector<8x8xf32>
    %134 = tpu.matmul %132, %133, %cst_39 {dimension_numbers = #tpu.dot_dimension_numbers<[1], [0], [0], [1], [0, 0, 1, 1], [], []>} : vector<8x8xbf16>, vector<8x8xbf16>, vector<8x8xf32> -> vector<8x8xf32>
    %c0_40 = arith.constant 0 : index
    %c24 = arith.constant 24 : index
    %135 = vector.load %arg14[%c0_40, %c24] : memref<16x32xf32, #tpu.memory_space<vmem>>, vector<8x8xf32>
    tpu.vector_store %arg14[%c0_40, %c24], %134 {strides = array<i32>} : memref<16x32xf32, #tpu.memory_space<vmem>>, vector<8x8xf32>,
    %136 = vector.extract_strided_slice %35 {offsets = [1, 0], sizes = [1, 8], strides = [1, 1]} : vector<2x8xf32> to vector<1x8xf32>
    %137 = vector.extract_strided_slice %32 {offsets = [8, 0], sizes = [8, 32], strides = [1, 1]} : vector<16x32xf32> to vector<8x32xf32>
    %138 = vector.extract_strided_slice %33 {offsets = [8, 0], sizes = [8, 32], strides = [1, 1]} : vector<16x32xf32> to vector<8x32xf32>
    %139 = vector.extract_strided_slice %34 {offsets = [8, 0], sizes = [8, 32], strides = [1, 1]} : vector<16x32xf32> to vector<8x32xf32>
    %140 = vector.extract_strided_slice %137 {offsets = [0, 0], sizes = [8, 8], strides = [1, 1]} : vector<8x32xf32> to vector<8x8xf32>
    %141 = vector.extract_strided_slice %138 {offsets = [0, 0], sizes = [8, 8], strides = [1, 1]} : vector<8x32xf32> to vector<8x8xf32>
    %142 = tpu.transpose %141, [1, 0] : vector<8x8xf32> -> vector<8x8xf32>
    %143 = arith.truncf %140 : vector<8x8xf32> to vector<8x8xbf16>
    %144 = arith.truncf %142 : vector<8x8xf32> to vector<8x8xbf16>
    %cst_41 = arith.constant dense<0.000000e+00> : vector<8x8xf32>
    %145 = tpu.matmul %143, %144, %cst_41 {dimension_numbers = #tpu.dot_dimension_numbers<[1], [0], [0], [1], [0, 0, 1, 1], [], []>} : vector<8x8xbf16>, vector<8x8xbf16>, vector<8x8xf32> -> vector<8x8xf32>
    %146 = vector.broadcast %136 : vector<1x8xf32> to vector<8x8xf32>
    %147 = arith.addf %145, %146 : vector<8x8xf32>
    %cst_42 = arith.constant dense<0xFF800000> : vector<8xf32>
    %148 = vector.multi_reduction <maximumf>, %147, %cst_42 [1] : vector<8x8xf32> to vector<8xf32>
    %cst_43 = arith.constant 0xFF800000 : f32
    %149 = vector.broadcast %cst_43 : f32 to vector<8xf32>
    %150 = arith.maximumf %149, %148 : vector<8xf32>
    %151 = vector.shape_cast %150 : vector<8xf32> to vector<8x1xf32>
    %152 = vector.broadcast %151 : vector<8x1xf32> to vector<8x8xf32>
    %153 = arith.subf %147, %152 : vector<8x8xf32>
    %154 = math.exp %153 : vector<8x8xf32>
    %cst_44 = arith.constant dense<0.000000e+00> : vector<8xf32>
    %155 = vector.multi_reduction <add>, %154, %cst_44 [1] : vector<8x8xf32> to vector<8xf32>
    %156 = vector.shape_cast %155 : vector<8xf32> to vector<8x1xf32>
    %157 = vector.broadcast %156 : vector<8x1xf32> to vector<8x8xf32>
    %158 = arith.divf %154, %157 : vector<8x8xf32>
    %159 = vector.extract_strided_slice %139 {offsets = [0, 0], sizes = [8, 8], strides = [1, 1]} : vector<8x32xf32> to vector<8x8xf32>
    %160 = arith.truncf %158 : vector<8x8xf32> to vector<8x8xbf16>
    %161 = arith.truncf %159 : vector<8x8xf32> to vector<8x8xbf16>
    %cst_45 = arith.constant dense<0.000000e+00> : vector<8x8xf32>
    %162 = tpu.matmul %160, %161, %cst_45 {dimension_numbers = #tpu.dot_dimension_numbers<[1], [0], [0], [1], [0, 0, 1, 1], [], []>} : vector<8x8xbf16>, vector<8x8xbf16>, vector<8x8xf32> -> vector<8x8xf32>
    %c8_46 = arith.constant 8 : index
    %c0_47 = arith.constant 0 : index
    %163 = vector.load %arg14[%c8_46, %c0_47] : memref<16x32xf32, #tpu.memory_space<vmem>>, vector<8x8xf32>
    tpu.vector_store %arg14[%c8_46, %c0_47], %162 {strides = array<i32>} : memref<16x32xf32, #tpu.memory_space<vmem>>, vector<8x8xf32>,
    %164 = vector.extract_strided_slice %137 {offsets = [0, 8], sizes = [8, 8], strides = [1, 1]} : vector<8x32xf32> to vector<8x8xf32>
    %165 = vector.extract_strided_slice %138 {offsets = [0, 8], sizes = [8, 8], strides = [1, 1]} : vector<8x32xf32> to vector<8x8xf32>
    %166 = tpu.transpose %165, [1, 0] : vector<8x8xf32> -> vector<8x8xf32>
    %167 = arith.truncf %164 : vector<8x8xf32> to vector<8x8xbf16>
    %168 = arith.truncf %166 : vector<8x8xf32> to vector<8x8xbf16>
    %cst_48 = arith.constant dense<0.000000e+00> : vector<8x8xf32>
    %169 = tpu.matmul %167, %168, %cst_48 {dimension_numbers = #tpu.dot_dimension_numbers<[1], [0], [0], [1], [0, 0, 1, 1], [], []>} : vector<8x8xbf16>, vector<8x8xbf16>, vector<8x8xf32> -> vector<8x8xf32>
    %170 = vector.broadcast %136 : vector<1x8xf32> to vector<8x8xf32>
    %171 = arith.addf %169, %170 : vector<8x8xf32>
    %cst_49 = arith.constant dense<0xFF800000> : vector<8xf32>
    %172 = vector.multi_reduction <maximumf>, %171, %cst_49 [1] : vector<8x8xf32> to vector<8xf32>
    %cst_50 = arith.constant 0xFF800000 : f32
    %173 = vector.broadcast %cst_50 : f32 to vector<8xf32>
    %174 = arith.maximumf %173, %172 : vector<8xf32>
    %175 = vector.shape_cast %174 : vector<8xf32> to vector<8x1xf32>
    %176 = vector.broadcast %175 : vector<8x1xf32> to vector<8x8xf32>
    %177 = arith.subf %171, %176 : vector<8x8xf32>
    %178 = math.exp %177 : vector<8x8xf32>
    %cst_51 = arith.constant dense<0.000000e+00> : vector<8xf32>
    %179 = vector.multi_reduction <add>, %178, %cst_51 [1] : vector<8x8xf32> to vector<8xf32>
    %180 = vector.shape_cast %179 : vector<8xf32> to vector<8x1xf32>
    %181 = vector.broadcast %180 : vector<8x1xf32> to vector<8x8xf32>
    %182 = arith.divf %178, %181 : vector<8x8xf32>
    %183 = vector.extract_strided_slice %139 {offsets = [0, 8], sizes = [8, 8], strides = [1, 1]} : vector<8x32xf32> to vector<8x8xf32>
    %184 = arith.truncf %182 : vector<8x8xf32> to vector<8x8xbf16>
    %185 = arith.truncf %183 : vector<8x8xf32> to vector<8x8xbf16>
    %cst_52 = arith.constant dense<0.000000e+00> : vector<8x8xf32>
    %186 = tpu.matmul %184, %185, %cst_52 {dimension_numbers = #tpu.dot_dimension_numbers<[1], [0], [0], [1], [0, 0, 1, 1], [], []>} : vector<8x8xbf16>, vector<8x8xbf16>, vector<8x8xf32> -> vector<8x8xf32>
    %c8_53 = arith.constant 8 : index
    %c8_54 = arith.constant 8 : index
    %187 = vector.load %arg14[%c8_53, %c8_54] : memref<16x32xf32, #tpu.memory_space<vmem>>, vector<8x8xf32>
    tpu.vector_store %arg14[%c8_53, %c8_54], %186 {strides = array<i32>} : memref<16x32xf32, #tpu.memory_space<vmem>>, vector<8x8xf32>,
    %188 = vector.extract_strided_slice %137 {offsets = [0, 16], sizes = [8, 8], strides = [1, 1]} : vector<8x32xf32> to vector<8x8xf32>
    %189 = vector.extract_strided_slice %138 {offsets = [0, 16], sizes = [8, 8], strides = [1, 1]} : vector<8x32xf32> to vector<8x8xf32>
    %190 = tpu.transpose %189, [1, 0] : vector<8x8xf32> -> vector<8x8xf32>
    %191 = arith.truncf %188 : vector<8x8xf32> to vector<8x8xbf16>
    %192 = arith.truncf %190 : vector<8x8xf32> to vector<8x8xbf16>
    %cst_55 = arith.constant dense<0.000000e+00> : vector<8x8xf32>
    %193 = tpu.matmul %191, %192, %cst_55 {dimension_numbers = #tpu.dot_dimension_numbers<[1], [0], [0], [1], [0, 0, 1, 1], [], []>} : vector<8x8xbf16>, vector<8x8xbf16>, vector<8x8xf32> -> vector<8x8xf32>
    %194 = vector.broadcast %136 : vector<1x8xf32> to vector<8x8xf32>
    %195 = arith.addf %193, %194 : vector<8x8xf32>
    %cst_56 = arith.constant dense<0xFF800000> : vector<8xf32>
    %196 = vector.multi_reduction <maximumf>, %195, %cst_56 [1] : vector<8x8xf32> to vector<8xf32>
    %cst_57 = arith.constant 0xFF800000 : f32
    %197 = vector.broadcast %cst_57 : f32 to vector<8xf32>
    %198 = arith.maximumf %197, %196 : vector<8xf32>
    %199 = vector.shape_cast %198 : vector<8xf32> to vector<8x1xf32>
    %200 = vector.broadcast %199 : vector<8x1xf32> to vector<8x8xf32>
    %201 = arith.subf %195, %200 : vector<8x8xf32>
    %202 = math.exp %201 : vector<8x8xf32>
    %cst_58 = arith.constant dense<0.000000e+00> : vector<8xf32>
    %203 = vector.multi_reduction <add>, %202, %cst_58 [1] : vector<8x8xf32> to vector<8xf32>
    %204 = vector.shape_cast %203 : vector<8xf32> to vector<8x1xf32>
    %205 = vector.broadcast %204 : vector<8x1xf32> to vector<8x8xf32>
    %206 = arith.divf %202, %205 : vector<8x8xf32>
    %207 = vector.extract_strided_slice %139 {offsets = [0, 16], sizes = [8, 8], strides = [1, 1]} : vector<8x32xf32> to vector<8x8xf32>
    %208 = arith.truncf %206 : vector<8x8xf32> to vector<8x8xbf16>
    %209 = arith.truncf %207 : vector<8x8xf32> to vector<8x8xbf16>
    %cst_59 = arith.constant dense<0.000000e+00> : vector<8x8xf32>
    %210 = tpu.matmul %208, %209, %cst_59 {dimension_numbers = #tpu.dot_dimension_numbers<[1], [0], [0], [1], [0, 0, 1, 1], [], []>} : vector<8x8xbf16>, vector<8x8xbf16>, vector<8x8xf32> -> vector<8x8xf32>
    %c8_60 = arith.constant 8 : index
    %c16_61 = arith.constant 16 : index
    %211 = vector.load %arg14[%c8_60, %c16_61] : memref<16x32xf32, #tpu.memory_space<vmem>>, vector<8x8xf32>
    tpu.vector_store %arg14[%c8_60, %c16_61], %210 {strides = array<i32>} : memref<16x32xf32, #tpu.memory_space<vmem>>, vector<8x8xf32>,
    %212 = vector.extract_strided_slice %137 {offsets = [0, 24], sizes = [8, 8], strides = [1, 1]} : vector<8x32xf32> to vector<8x8xf32>
    %213 = vector.extract_strided_slice %138 {offsets = [0, 24], sizes = [8, 8], strides = [1, 1]} : vector<8x32xf32> to vector<8x8xf32>
    %214 = tpu.transpose %213, [1, 0] : vector<8x8xf32> -> vector<8x8xf32>
    %215 = arith.truncf %212 : vector<8x8xf32> to vector<8x8xbf16>
    %216 = arith.truncf %214 : vector<8x8xf32> to vector<8x8xbf16>
    %cst_62 = arith.constant dense<0.000000e+00> : vector<8x8xf32>
    %217 = tpu.matmul %215, %216, %cst_62 {dimension_numbers = #tpu.dot_dimension_numbers<[1], [0], [0], [1], [0, 0, 1, 1], [], []>} : vector<8x8xbf16>, vector<8x8xbf16>, vector<8x8xf32> -> vector<8x8xf32>
    %218 = vector.broadcast %136 : vector<1x8xf32> to vector<8x8xf32>
    %219 = arith.addf %217, %218 : vector<8x8xf32>
    %cst_63 = arith.constant dense<0xFF800000> : vector<8xf32>
    %220 = vector.multi_reduction <maximumf>, %219, %cst_63 [1] : vector<8x8xf32> to vector<8xf32>
    %cst_64 = arith.constant 0xFF800000 : f32
    %221 = vector.broadcast %cst_64 : f32 to vector<8xf32>
    %222 = arith.maximumf %221, %220 : vector<8xf32>
    %223 = vector.shape_cast %222 : vector<8xf32> to vector<8x1xf32>
    %224 = vector.broadcast %223 : vector<8x1xf32> to vector<8x8xf32>
    %225 = arith.subf %219, %224 : vector<8x8xf32>
    %226 = math.exp %225 : vector<8x8xf32>
    %cst_65 = arith.constant dense<0.000000e+00> : vector<8xf32>
    %227 = vector.multi_reduction <add>, %226, %cst_65 [1] : vector<8x8xf32> to vector<8xf32>
    %228 = vector.shape_cast %227 : vector<8xf32> to vector<8x1xf32>
    %229 = vector.broadcast %228 : vector<8x1xf32> to vector<8x8xf32>
    %230 = arith.divf %226, %229 : vector<8x8xf32>
    %231 = vector.extract_strided_slice %139 {offsets = [0, 24], sizes = [8, 8], strides = [1, 1]} : vector<8x32xf32> to vector<8x8xf32>
    %232 = arith.truncf %230 : vector<8x8xf32> to vector<8x8xbf16>
    %233 = arith.truncf %231 : vector<8x8xf32> to vector<8x8xbf16>
    %cst_66 = arith.constant dense<0.000000e+00> : vector<8x8xf32>
    %234 = tpu.matmul %232, %233, %cst_66 {dimension_numbers = #tpu.dot_dimension_numbers<[1], [0], [0], [1], [0, 0, 1, 1], [], []>} : vector<8x8xbf16>, vector<8x8xbf16>, vector<8x8xf32> -> vector<8x8xf32>
    %c8_67 = arith.constant 8 : index
    %c24_68 = arith.constant 24 : index
    %235 = vector.load %arg14[%c8_67, %c24_68] : memref<16x32xf32, #tpu.memory_space<vmem>>, vector<8x8xf32>
    tpu.vector_store %arg14[%c8_67, %c24_68], %234 {strides = array<i32>} : memref<16x32xf32, #tpu.memory_space<vmem>>, vector<8x8xf32>,
    %c0_69 = arith.constant 0 : index
    %c0_70 = arith.constant 0 : index
    %236 = vector.load %arg14[%c0_69, %c0_70] : memref<16x32xf32, #tpu.memory_space<vmem>>, vector<16x32xf32>
    %c0_71 = arith.constant 0 : index
    %c0_72 = arith.constant 0 : index
    %237 = vector.load %arg5[%c0_71, %c0_72] : memref<32x32xf32, #tpu.memory_space<vmem>>, vector<32x32xf32>
    %238 = arith.truncf %236 : vector<16x32xf32> to vector<16x32xbf16>
    %239 = arith.truncf %237 : vector<32x32xf32> to vector<32x32xbf16>
    %cst_73 = arith.constant dense<0.000000e+00> : vector<16x32xf32>
    %240 = tpu.matmul %238, %239, %cst_73 {dimension_numbers = #tpu.dot_dimension_numbers<[1], [0], [0], [1], [0, 0, 1, 1], [], []>} : vector<16x32xbf16>, vector<32x32xbf16>, vector<16x32xf32> -> vector<16x32xf32>
    %c0_74 = arith.constant 0 : index
    %c0_75 = arith.constant 0 : index
    %241 = vector.load %arg6[%c0_74, %c0_75] : memref<1x32xf32, #tpu.memory_space<vmem>>, vector<1x32xf32>
    %242 = vector.broadcast %241 : vector<1x32xf32> to vector<16x32xf32>
    %243 = arith.addf %240, %242 : vector<16x32xf32>
    %244 = arith.addf %243, %24 : vector<16x32xf32>
    %c1 = arith.constant 1 : index
    %c0_76 = arith.constant 0 : index
    %245 = vector.load %arg11[%c1, %c0_76] : memref<3x32xf32, #tpu.memory_space<vmem>>, vector<1x32xf32>
    %c1_77 = arith.constant 1 : index
    %c0_78 = arith.constant 0 : index
    %246 = vector.load %arg12[%c1_77, %c0_78] : memref<3x32xf32, #tpu.memory_space<vmem>>, vector<1x32xf32>
    %cst_79 = arith.constant dense<0.000000e+00> : vector<16xf32>
    %247 = vector.multi_reduction <add>, %244, %cst_79 [1] : vector<16x32xf32> to vector<16xf32>
    %248 = vector.shape_cast %247 : vector<16xf32> to vector<16x1xf32>
    %cst_80 = arith.constant 3.200000e+01 : f32
    %249 = vector.broadcast %cst_80 : f32 to vector<16x1xf32>
    %250 = arith.divf %248, %249 : vector<16x1xf32>
    %251 = vector.broadcast %250 : vector<16x1xf32> to vector<16x32xf32>
    %252 = arith.subf %244, %251 : vector<16x32xf32>
    %253 = arith.mulf %252, %252 : vector<16x32xf32>
    %cst_81 = arith.constant dense<0.000000e+00> : vector<16xf32>
    %254 = vector.multi_reduction <add>, %253, %cst_81 [1] : vector<16x32xf32> to vector<16xf32>
    %255 = vector.shape_cast %254 : vector<16xf32> to vector<16x1xf32>
    %cst_82 = arith.constant 3.200000e+01 : f32
    %256 = vector.broadcast %cst_82 : f32 to vector<16x1xf32>
    %257 = arith.divf %255, %256 : vector<16x1xf32>
    %258 = vector.broadcast %250 : vector<16x1xf32> to vector<16x32xf32>
    %259 = arith.subf %244, %258 : vector<16x32xf32>
    %cst_83 = arith.constant 9.99999996E-13 : f32
    %260 = vector.broadcast %cst_83 : f32 to vector<16x1xf32>
    %261 = arith.addf %257, %260 : vector<16x1xf32>
    %262 = math.rsqrt %261 : vector<16x1xf32>
    %263 = vector.broadcast %262 : vector<16x1xf32> to vector<16x32xf32>
    %264 = arith.mulf %259, %263 : vector<16x32xf32>
    %265 = vector.broadcast %245 : vector<1x32xf32> to vector<16x32xf32>
    %266 = arith.mulf %264, %265 : vector<16x32xf32>
    %267 = vector.broadcast %246 : vector<1x32xf32> to vector<16x32xf32>
    %268 = arith.addf %266, %267 : vector<16x32xf32>
    %c0_84 = arith.constant 0 : index
    %c0_85 = arith.constant 0 : index
    %269 = vector.load %arg7[%c0_84, %c0_85] : memref<32x64xf32, #tpu.memory_space<vmem>>, vector<32x64xf32>
    %270 = arith.truncf %268 : vector<16x32xf32> to vector<16x32xbf16>
    %271 = arith.truncf %269 : vector<32x64xf32> to vector<32x64xbf16>
    %cst_86 = arith.constant dense<0.000000e+00> : vector<16x64xf32>
    %272 = tpu.matmul %270, %271, %cst_86 {dimension_numbers = #tpu.dot_dimension_numbers<[1], [0], [0], [1], [0, 0, 1, 1], [], []>} : vector<16x32xbf16>, vector<32x64xbf16>, vector<16x64xf32> -> vector<16x64xf32>
    %c0_87 = arith.constant 0 : index
    %c0_88 = arith.constant 0 : index
    %273 = vector.load %arg8[%c0_87, %c0_88] : memref<1x64xf32, #tpu.memory_space<vmem>>, vector<1x64xf32>
    %274 = vector.broadcast %273 : vector<1x64xf32> to vector<16x64xf32>
    %275 = arith.addf %272, %274 : vector<16x64xf32>
    %276 = arith.mulf %275, %275 : vector<16x64xf32>
    %277 = arith.mulf %275, %276 : vector<16x64xf32>
    %cst_89 = arith.constant 4.471500e-02 : f32
    %278 = vector.broadcast %cst_89 : f32 to vector<16x64xf32>
    %279 = arith.mulf %278, %277 : vector<16x64xf32>
    %280 = arith.addf %275, %279 : vector<16x64xf32>
    %cst_90 = arith.constant 0.797884583 : f32
    %281 = vector.broadcast %cst_90 : f32 to vector<16x64xf32>
    %282 = arith.mulf %281, %280 : vector<16x64xf32>
    %283 = math.tanh %282 : vector<16x64xf32>
    %cst_91 = arith.constant 1.000000e+00 : f32
    %284 = vector.broadcast %cst_91 : f32 to vector<16x64xf32>
    %285 = arith.addf %284, %283 : vector<16x64xf32>
    %cst_92 = arith.constant 5.000000e-01 : f32
    %286 = vector.broadcast %cst_92 : f32 to vector<16x64xf32>
    %287 = arith.mulf %286, %285 : vector<16x64xf32>
    %288 = arith.mulf %275, %287 : vector<16x64xf32>
    %c0_93 = arith.constant 0 : index
    %c0_94 = arith.constant 0 : index
    %289 = vector.load %arg9[%c0_93, %c0_94] : memref<64x32xf32, #tpu.memory_space<vmem>>, vector<64x32xf32>
    %290 = arith.truncf %288 : vector<16x64xf32> to vector<16x64xbf16>
    %291 = arith.truncf %289 : vector<64x32xf32> to vector<64x32xbf16>
    %cst_95 = arith.constant dense<0.000000e+00> : vector<16x32xf32>
    %292 = tpu.matmul %290, %291, %cst_95 {dimension_numbers = #tpu.dot_dimension_numbers<[1], [0], [0], [1], [0, 0, 1, 1], [], []>} : vector<16x64xbf16>, vector<64x32xbf16>, vector<16x32xf32> -> vector<16x32xf32>
    %c0_96 = arith.constant 0 : index
    %c0_97 = arith.constant 0 : index
    %293 = vector.load %arg10[%c0_96, %c0_97] : memref<1x32xf32, #tpu.memory_space<vmem>>, vector<1x32xf32>
    %294 = vector.broadcast %293 : vector<1x32xf32> to vector<16x32xf32>
    %295 = arith.addf %292, %294 : vector<16x32xf32>
    %296 = arith.addf %295, %268 : vector<16x32xf32>
    %c2 = arith.constant 2 : index
    %c0_98 = arith.constant 0 : index
    %297 = vector.load %arg11[%c2, %c0_98] : memref<3x32xf32, #tpu.memory_space<vmem>>, vector<1x32xf32>
    %c2_99 = arith.constant 2 : index
    %c0_100 = arith.constant 0 : index
    %298 = vector.load %arg12[%c2_99, %c0_100] : memref<3x32xf32, #tpu.memory_space<vmem>>, vector<1x32xf32>
    %cst_101 = arith.constant dense<0.000000e+00> : vector<16xf32>
    %299 = vector.multi_reduction <add>, %296, %cst_101 [1] : vector<16x32xf32> to vector<16xf32>
    %300 = vector.shape_cast %299 : vector<16xf32> to vector<16x1xf32>
    %cst_102 = arith.constant 3.200000e+01 : f32
    %301 = vector.broadcast %cst_102 : f32 to vector<16x1xf32>
    %302 = arith.divf %300, %301 : vector<16x1xf32>
    %303 = vector.broadcast %302 : vector<16x1xf32> to vector<16x32xf32>
    %304 = arith.subf %296, %303 : vector<16x32xf32>
    %305 = arith.mulf %304, %304 : vector<16x32xf32>
    %cst_103 = arith.constant dense<0.000000e+00> : vector<16xf32>
    %306 = vector.multi_reduction <add>, %305, %cst_103 [1] : vector<16x32xf32> to vector<16xf32>
    %307 = vector.shape_cast %306 : vector<16xf32> to vector<16x1xf32>
    %cst_104 = arith.constant 3.200000e+01 : f32
    %308 = vector.broadcast %cst_104 : f32 to vector<16x1xf32>
    %309 = arith.divf %307, %308 : vector<16x1xf32>
    %310 = vector.broadcast %302 : vector<16x1xf32> to vector<16x32xf32>
    %311 = arith.subf %296, %310 : vector<16x32xf32>
    %cst_105 = arith.constant 9.99999996E-13 : f32
    %312 = vector.broadcast %cst_105 : f32 to vector<16x1xf32>
    %313 = arith.addf %309, %312 : vector<16x1xf32>
    %314 = math.rsqrt %313 : vector<16x1xf32>
    %315 = vector.broadcast %314 : vector<16x1xf32> to vector<16x32xf32>
    %316 = arith.mulf %311, %315 : vector<16x32xf32>
    %317 = vector.broadcast %297 : vector<1x32xf32> to vector<16x32xf32>
    %318 = arith.mulf %316, %317 : vector<16x32xf32>
    %319 = vector.broadcast %298 : vector<1x32xf32> to vector<16x32xf32>
    %320 = arith.addf %318, %319 : vector<16x32xf32>
    %c0_106 = arith.constant 0 : index
    %c0_107 = arith.constant 0 : index
    %321 = vector.load %arg13[%c0_106, %c0_107] : memref<16x32xf32, #tpu.memory_space<vmem>>, vector<16x32xf32>
    tpu.vector_store %arg13[%c0_106, %c0_107], %320 {strides = array<i32>} : memref<16x32xf32, #tpu.memory_space<vmem>>, vector<16x32xf32>,
    return
  }
  func.func @transform_0(%arg0: i32) -> (i32, i32) {
    %c0_i32 = arith.constant 0 : i32
    %c0_i32_0 = arith.constant 0 : i32
    %c0_i32_1 = arith.constant 0 : i32
    return %c0_i32, %c0_i32_0 : i32, i32
  }
  func.func @transform_1(%arg0: i32) -> (i32, i32) {
    %c0_i32 = arith.constant 0 : i32
    %c0_i32_0 = arith.constant 0 : i32
    %c0_i32_1 = arith.constant 0 : i32
    return %c0_i32, %c0_i32_0 : i32, i32
  }
  func.func @transform_2(%arg0: i32) -> (i32, i32) {
    %c0_i32 = arith.constant 0 : i32
    %c0_i32_0 = arith.constant 0 : i32
    %c0_i32_1 = arith.constant 0 : i32
    return %c0_i32, %c0_i32_0 : i32, i32
  }
  func.func @transform_3(%arg0: i32) -> (i32, i32) {
    %c0_i32 = arith.constant 0 : i32
    %c0_i32_0 = arith.constant 0 : i32
    %c0_i32_1 = arith.constant 0 : i32
    return %c0_i32, %c0_i32_0 : i32, i32
  }
  func.func @transform_4(%arg0: i32) -> (i32, i32) {
    %c0_i32 = arith.constant 0 : i32
    %c0_i32_0 = arith.constant 0 : i32
    %c0_i32_1 = arith.constant 0 : i32
    return %c0_i32, %c0_i32_0 : i32, i32
  }
  func.func @transform_5(%arg0: i32) -> (i32, i32) {
    %c0_i32 = arith.constant 0 : i32
    %c0_i32_0 = arith.constant 0 : i32
    %c0_i32_1 = arith.constant 0 : i32
    return %c0_i32, %c0_i32_0 : i32, i32
  }
  func.func @transform_6(%arg0: i32) -> (i32, i32) {
    %c0_i32 = arith.constant 0 : i32
    %c0_i32_0 = arith.constant 0 : i32
    %c0_i32_1 = arith.constant 0 : i32
    return %c0_i32, %c0_i32_0 : i32, i32
  }
  func.func @transform_7(%arg0: i32) -> (i32, i32) {
    %c0_i32 = arith.constant 0 : i32
    %c0_i32_0 = arith.constant 0 : i32
    %c0_i32_1 = arith.constant 0 : i32
    return %c0_i32, %c0_i32_0 : i32, i32
  }
  func.func @transform_8(%arg0: i32) -> (i32, i32) {
    %c0_i32 = arith.constant 0 : i32
    %c0_i32_0 = arith.constant 0 : i32
    %c0_i32_1 = arith.constant 0 : i32
    return %c0_i32, %c0_i32_0 : i32, i32
  }
  func.func @transform_9(%arg0: i32) -> (i32, i32) {
    %c0_i32 = arith.constant 0 : i32
    %c0_i32_0 = arith.constant 0 : i32
    %c0_i32_1 = arith.constant 0 : i32
    return %c0_i32, %c0_i32_0 : i32, i32
  }
  func.func @transform_10(%arg0: i32) -> (i32, i32) {
    %c0_i32 = arith.constant 0 : i32
    %c0_i32_0 = arith.constant 0 : i32
    %c0_i32_1 = arith.constant 0 : i32
    return %c0_i32, %c0_i32_0 : i32, i32
  }
  func.func @transform_11(%arg0: i32) -> (i32, i32) {
    %c0_i32 = arith.constant 0 : i32
    %c0_i32_0 = arith.constant 0 : i32
    %c0_i32_1 = arith.constant 0 : i32
    return %c0_i32, %c0_i32_0 : i32, i32
  }
  func.func @transform_12(%arg0: i32) -> (i32, i32) {
    %c0_i32 = arith.constant 0 : i32
    %c0_i32_0 = arith.constant 0 : i32
    %c0_i32_1 = arith.constant 0 : i32
    return %c0_i32, %c0_i32_0 : i32, i32
  }
}

</mosaic_0001>

<llo_original>
// kernel: tpu_custom_call.1
$region0: #{tpu_custom_call.1}
  #allocation0 [shape = 'u32[]', space=smem, size = 0x4, offset = 0x4, fixed_abs, tag = 'smem constant byte address 0x4 - core index']
  #allocation1 [shape = 'u32[144,128]{1,0:T(1,128)}', space=vmem, size = 0x12000, scoped, tag = 'internal scratch']
  #allocation2 [shape = 'f32[16,32]{1,0:T(8,128)}', space=vmem, size = 0x2000, scoped, tag = 'scratch operand']
  %s0 = inlined_call_operand.hbm [shape: f32[16,32], index: 0, kind: input, shape index: {}]
  %s1 = inlined_call_operand.hbm [shape: f32[2,8], index: 1, kind: input, shape index: {}]
  %s2 = inlined_call_operand.vmem [shape: f32[32,96], index: 2, kind: input, shape index: {}]
  %s3 = inlined_call_operand.vmem [shape: f32[1,96], index: 3, kind: input, shape index: {}]
  %s4 = inlined_call_operand.vmem [shape: f32[32,32], index: 4, kind: input, shape index: {}]
  %s5 = inlined_call_operand.hbm [shape: f32[1,32], index: 5, kind: input, shape index: {}]
  %s6 = inlined_call_operand.vmem [shape: f32[32,64], index: 6, kind: input, shape index: {}]
  %s7 = inlined_call_operand.vmem [shape: f32[1,64], index: 7, kind: input, shape index: {}]
  %s8 = inlined_call_operand.vmem [shape: f32[64,32], index: 8, kind: input, shape index: {}]
  %s9 = inlined_call_operand.vmem [shape: f32[1,32], index: 9, kind: input, shape index: {}]
  %s10 = inlined_call_operand.vmem [shape: f32[3,32], index: 10, kind: input, shape index: {}]
  %s11 = inlined_call_operand.vmem [shape: f32[3,32], index: 11, kind: input, shape index: {}]
  %s12 = inlined_call_operand.hbm [shape: f32[16,32], index: 12, kind: output, shape index: {}]
  %s13 = sld [smem:[#allocation0]]
  $region70: #{tpu_custom_call.1} parent=0
    _
  %s15 = ssub.s32 1, %s13
  %s16 = scalar_select 0, %s15, %s13
  $region1: #{tpu_custom_call.1} parent=0
    #allocation3 [shape = 'u8[8192]{0}', space=vmem, size = 0x2000, scoped, tag = 'input window, operand 0, single buffered']
    #allocation4 [shape = 's32[1]{0}', space=sflag, size = 0x4, scoped, tag = 'scoped memory for tpu_custom_call.1']
    #allocation5 [shape = 's32[1]{0}', space=sflag, size = 0x4, scoped, tag = 'scoped memory for tpu_custom_call.1']
    #allocation6 [shape = 'u8[1024]{0}', space=vmem, size = 0x400, scoped, tag = 'input window, operand 1, single buffered']
    #allocation7 [shape = 's32[1]{0}', space=sflag, size = 0x4, scoped, tag = 'scoped memory for tpu_custom_call.1']
    #allocation8 [shape = 'u8[512]{0}', space=vmem, size = 0x400, scoped, tag = 'input window, operand 5, single buffered']
    #allocation9 [shape = 'u8[8192]{0}', space=vmem, size = 0x2000, scoped, tag = 'output window, operand 0, single buffered']
    %17 = vsyncpa [#allocation4], 0
    %18 = vsyncpa [#allocation7], 0
    %19 = vsyncpa [#allocation5], 0
    // Predicated region
    $region2: #{tpu_custom_call.1} parent=1 // pred_check
      _
    $region3: #{tpu_custom_call.1} parent=1 // pred_check_branch
      %21 = sbr.rel (0) target = $region5
    $region4: #{tpu_custom_call.1} parent=1 // pred_region
      %s23 = ssub.s32 256, 256
      %24 = vsyncadd [#allocation4], %s23
      %s25 = sshll.u32 [#allocation3], 4
      %s26 = int_to_ptr.vmem [resolvable:$true] %s25
      %31 = dma.hbm_to_vmem [thread:$0]  %s0, 256, %s26, [#allocation4], 128, 128, 8
    $region5: #{tpu_custom_call.1} parent=1 // pred_fallthru
      _
    // Predicated region
    $region6: #{tpu_custom_call.1} parent=1 // pred_check
      _
    $region7: #{tpu_custom_call.1} parent=1 // pred_check_branch
      %33 = sbr.rel (0) target = $region9
    $region8: #{tpu_custom_call.1} parent=1 // pred_region
      %s35 = ssub.s32 32, 32
      %36 = vsyncadd [#allocation7], %s35
      %s38 = sshll.u32 [#allocation6], 4
      %s39 = int_to_ptr.vmem [resolvable:$true] %s38
      %41 = dma.hbm_to_vmem [thread:$0]  %s1, 32, %s39, [#allocation7]
    $region9: #{tpu_custom_call.1} parent=1 // pred_fallthru
      _
    // Predicated region
    $region10: #{tpu_custom_call.1} parent=1 // pred_check
      _
    $region11: #{tpu_custom_call.1} parent=1 // pred_check_branch
      %43 = sbr.rel (0) target = $region13
    $region12: #{tpu_custom_call.1} parent=1 // pred_region
      _
    $region13: #{tpu_custom_call.1} parent=1 // pred_fallthru
      _
    // Predicated region
    $region14: #{tpu_custom_call.1} parent=1 // pred_check
      _
    $region15: #{tpu_custom_call.1} parent=1 // pred_check_branch
      %45 = sbr.rel (0) target = $region17
    $region16: #{tpu_custom_call.1} parent=1 // pred_region
      _
    $region17: #{tpu_custom_call.1} parent=1 // pred_fallthru
      _
    // Predicated region
    $region18: #{tpu_custom_call.1} parent=1 // pred_check
      _
    $region19: #{tpu_custom_call.1} parent=1 // pred_check_branch
      %47 = sbr.rel (0) target = $region21
    $region20: #{tpu_custom_call.1} parent=1 // pred_region
      _
    $region21: #{tpu_custom_call.1} parent=1 // pred_fallthru
      _
    // Predicated region
    $region22: #{tpu_custom_call.1} parent=1 // pred_check
      _
    $region23: #{tpu_custom_call.1} parent=1 // pred_check_branch
      %49 = sbr.rel (0) target = $region25
    $region24: #{tpu_custom_call.1} parent=1 // pred_region
      %s51 = ssub.s32 16, 16
      %52 = vsyncadd [#allocation7], %s51
      %s54 = sshll.u32 [#allocation8], 4
      %s55 = int_to_ptr.vmem [resolvable:$true] %s54
      %57 = dma.hbm_to_vmem [thread:$0]  %s5, 16, %s55, [#allocation7]
    $region25: #{tpu_custom_call.1} parent=1 // pred_fallthru
      _
    // Predicated region
    $region26: #{tpu_custom_call.1} parent=1 // pred_check
      _
    $region27: #{tpu_custom_call.1} parent=1 // pred_check_branch
      %59 = sbr.rel (0) target = $region29
    $region28: #{tpu_custom_call.1} parent=1 // pred_region
      _
    $region29: #{tpu_custom_call.1} parent=1 // pred_fallthru
      _
    // Predicated region
    $region30: #{tpu_custom_call.1} parent=1 // pred_check
      _
    $region31: #{tpu_custom_call.1} parent=1 // pred_check_branch
      %61 = sbr.rel (0) target = $region33
    $region32: #{tpu_custom_call.1} parent=1 // pred_region
      _
    $region33: #{tpu_custom_call.1} parent=1 // pred_fallthru
      _
    // Predicated region
    $region34: #{tpu_custom_call.1} parent=1 // pred_check
      _
    $region35: #{tpu_custom_call.1} parent=1 // pred_check_branch
      %63 = sbr.rel (0) target = $region37
    $region36: #{tpu_custom_call.1} parent=1 // pred_region
      _
    $region37: #{tpu_custom_call.1} parent=1 // pred_fallthru
      _
    // Predicated region
    $region38: #{tpu_custom_call.1} parent=1 // pred_check
      _
    $region39: #{tpu_custom_call.1} parent=1 // pred_check_branch
      %65 = sbr.rel (0) target = $region41
    $region40: #{tpu_custom_call.1} parent=1 // pred_region
      _
    $region41: #{tpu_custom_call.1} parent=1 // pred_fallthru
      _
    // Predicated region
    $region42: #{tpu_custom_call.1} parent=1 // pred_check
      _
    $region43: #{tpu_custom_call.1} parent=1 // pred_check_branch
      %67 = sbr.rel (0) target = $region45
    $region44: #{tpu_custom_call.1} parent=1 // pred_region
      _
    $region45: #{tpu_custom_call.1} parent=1 // pred_fallthru
      _
    // Predicated region
    $region46: #{tpu_custom_call.1} parent=1 // pred_check
      _
    $region47: #{tpu_custom_call.1} parent=1 // pred_check_branch
      %69 = sbr.rel (0) target = $region49
    $region48: #{tpu_custom_call.1} parent=1 // pred_region
      _
    $region49: #{tpu_custom_call.1} parent=1 // pred_fallthru
      _
    // Predicated region
    $region50: #{tpu_custom_call.1} parent=1 // pred_check
      _
    $region51: #{tpu_custom_call.1} parent=1 // pred_check_branch
      %71 = sbr.rel (0) target = $region53
    $region52: #{tpu_custom_call.1} parent=1 // pred_region
      %72 = dma.done [#allocation4], 256
    $region53: #{tpu_custom_call.1} parent=1 // pred_fallthru
      _
    // Predicated region
    $region54: #{tpu_custom_call.1} parent=1 // pred_check
      _
    $region55: #{tpu_custom_call.1} parent=1 // pred_check_branch
      %74 = sbr.rel (0) target = $region57
    $region56: #{tpu_custom_call.1} parent=1 // pred_region
      %75 = dma.done [#allocation7], 32
    $region57: #{tpu_custom_call.1} parent=1 // pred_fallthru
      _
    // Predicated region
    $region58: #{tpu_custom_call.1} parent=1 // pred_check
      _
    $region59: #{tpu_custom_call.1} parent=1 // pred_check_branch
      %77 = sbr.rel (0) target = $region61
    $region60: #{tpu_custom_call.1} parent=1 // pred_region
      %78 = dma.done [#allocation7], 16
    $region61: #{tpu_custom_call.1} parent=1 // pred_fallthru
      _
    %v80 = vld [vmem:[#allocation3] sm:$0xff]
    %v81 = vld [vmem:[#allocation3 + $0x8] sm:$0xff]
    %v82 = vld [vmem:[%s10] sm:$0x1]
    %v83 = vld [vmem:[%s11] sm:$0x1]
    %vm84 = vcmask 261120
    %v85 = vsel %vm84, %v80, 0.0
    %86 = vadd.xlane.f32.xlu0 %v85
    %v87 = vpop.xlane.xlu0 %86
    %v88 = vsel %vm84, %v81, 0.0
    %89 = vadd.xlane.f32.xlu0 %v88
    %v90 = vpop.xlane.xlu0 %89
    %v91 = vrcp.pop 32.0
    %v92 = vmul.f32 %v87, %v91
    %v93 = vmul.f32 %v90, %v91
    %v94 = vsub.f32 %v80, %v92
    %v95 = vsub.f32 %v81, %v93
    %v96 = vmul.f32 %v94, %v94
    %v97 = vmul.f32 %v95, %v95
    %v98 = vsel %vm84, %v96, 0.0
    %99 = vadd.xlane.f32.xlu0 %v98
    %v100 = vpop.xlane.xlu0 %99
    %v101 = vsel %vm84, %v97, 0.0
    %102 = vadd.xlane.f32.xlu0 %v101
    %v103 = vpop.xlane.xlu0 %102
    %v104 = vmul.f32 %v100, %v91
    %v105 = vmul.f32 %v103, %v91
    %v106 = vadd.f32 %v104, 1e-12
    %v107 = vadd.f32 %v105, 1e-12
    %v108 = vrsqrt.pop %v106
    %v109 = vrsqrt.pop %v107
    %v110 = vmul.f32 %v94, %v108
    %v111 = vmul.f32 %v95, %v109
    %v112 = vlaneseq
    %v113 = vshrl.u32 %v112, 7
    %v114 = vsub.s32 0, %v113
    %v115 = vrot.slane %v82, %v114
    %v116 = vmul.f32 %v110, %v115
    %v117 = vmul.f32 %v111, %v115
    %v118 = vlaneseq
    %v119 = vshrl.u32 %v118, 7
    %v120 = vsub.s32 0, %v119
    %v121 = vrot.slane %v83, %v120
    %v122 = vadd.f32 %v116, %v121
    %v123 = vadd.f32 %v117, %v121
    %v124 = vld [vmem:[%s2] sm:$0xff]
    %v125 = vld [vmem:[%s2 + $0x8] sm:$0xff]
    %v126 = vld [vmem:[%s2 + $0x10] sm:$0xff]
    %v127 = vld [vmem:[%s2 + $0x18] sm:$0xff]
    %v128 = vpack.c.bf16 %v123, %v122
    %v129 = vpack.c.bf16 %v125, %v124
    %v130 = vpack.c.bf16 %v127, %v126
    %v131 = vld [vmem:[%s3] sm:$0x1]
    %v133 = vlaneseq
    %v134 = vshrl.u32 %v133, 7
    %v135 = vsub.s32 0, %v134
    %v136 = vrot.slane %v131, %v135
    %v139 = vsel %vm84, %v128, 0
    %141 = vmatprep.subr.bf16.mxu0 0
    %142 = vmatpush1.bf16.msra.mxu0 0
    %143 = vmatprep.subr.bf16.mxu0 0
    %144 = vmatpush1.bf16.msra.mxu0 0
    %145 = vmatprep.subr.bf16.mxu0 0
    %146 = vmatpush1.bf16.msra.mxu0 0
    %147 = vmatprep.subr.bf16.mxu0 0
    %148 = vmatpush1.bf16.msra.mxu0 0
    %149 = vmatprep.subr.bf16.mxu0 0
    %150 = vmatpush1.bf16.msra.mxu0 0
    %151 = vmatprep.subr.bf16.mxu0 0
    %152 = vmatpush1.bf16.msra.mxu0 0
    %153 = vmatprep.subr.bf16.mxu0 0
    %154 = vmatpush1.bf16.msra.mxu0 %v130
    %155 = vmatprep.subr.bf16.mxu0 0
    %156 = vmatpush1.bf16.msra.mxu0 %v129
    %157 = vmatprep.subr.bf16.mxu0 0
    %158 = vmatpush2.bf16.msra.mxu0 0
    %159 = vmatprep.subr.bf16.mxu0 0
    %160 = vmatpush2.bf16.msra.mxu0 0
    %161 = vmatprep.subr.bf16.mxu0 0
    %162 = vmatpush2.bf16.msra.mxu0 0
    %163 = vmatprep.subr.bf16.mxu0 0
    %164 = vmatpush2.bf16.msra.mxu0 0
    %165 = vmatprep.subr.bf16.mxu0 0
    %166 = vmatpush2.bf16.msra.mxu0 0
    %167 = vmatprep.subr.bf16.mxu0 0
    %168 = vmatpush2.bf16.msra.mxu0 0
    %169 = vmatprep.subr.bf16.mxu0 0
    %170 = vmatpush2.bf16.msra.mxu0 0
    %171 = vmatprep.subr.bf16.mxu0 0
    %172 = vmatpush2.bf16.msra.mxu0 0
    %173 = vmatprep.mubr.bf16.mxu0 0
    %174 = vmatmul.mubr.bf16.gmra.mxu0 %v139
    %v175 = vpop.f32.mrf.mxu0
    %v176 = vadd.f32 %v136, %v175
    %v177 = vpop.f32.mrf.mxu0
    %v178 = vpop.f32.mrf.mxu0
    %v179 = vadd.f32 %v136, %v178
    %v180 = vpop.f32.mrf.mxu0
    %181 = vdwg.mxu0
    %v182 = vld [vmem:[#allocation6] sm:$0x3]
    %184 = vrot.lane.b32.xlu0 %v176, 96
    %v185 = vpop.permute.xlu0 %184
    %187 = vxpose.xlu0.b32.start [1/16] %v185, 128
    %188 = vxpose.xlu0.b32.cont [2/16] 0.0, 128
    %189 = vxpose.xlu0.b32.cont [3/16] 0.0, 128
    %190 = vxpose.xlu0.b32.cont [4/16] 0.0, 128
    %191 = vxpose.xlu0.b32.cont [5/16] 0.0, 128
    %192 = vxpose.xlu0.b32.cont [6/16] 0.0, 128
    %193 = vxpose.xlu0.b32.cont [7/16] 0.0, 128
    %194 = vxpose.xlu0.b32.cont [8/16] 0.0, 128
    %195 = vxpose.xlu0.b32.cont [9/16] 0.0, 128
    %196 = vxpose.xlu0.b32.cont [10/16] 0.0, 128
    %197 = vxpose.xlu0.b32.cont [11/16] 0.0, 128
    %198 = vxpose.xlu0.b32.cont [12/16] 0.0, 128
    %199 = vxpose.xlu0.b32.cont [13/16] 0.0, 128
    %200 = vxpose.xlu0.b32.cont [14/16] 0.0, 128
    %201 = vxpose.xlu0.b32.cont [15/16] 0.0, 128
    %202 = vxpose.xlu0.b32.end [16/16] 0.0, 128
    %v203 = vpop.trf.xlu0
    %v204 = vpop.trf.xlu0
    %v205 = vpop.trf.xlu0
    %v206 = vpop.trf.xlu0
    %v207 = vpop.trf.xlu0
    %v208 = vpop.trf.xlu0
    %v209 = vpop.trf.xlu0
    %v210 = vpop.trf.xlu0
    %v211 = vpop.trf.xlu0
    %v212 = vpop.trf.xlu0
    %v213 = vpop.trf.xlu0
    %v214 = vpop.trf.xlu0
    %v215 = vpop.trf.xlu0
    %v216 = vpop.trf.xlu0
    %v217 = vpop.trf.xlu0
    %v218 = vpop.trf.xlu0
    %v219 = vpack.c.bf16 %v176, %v176
    %v220 = vpack.c.bf16 %v203, %v203
    %v221 = vlaneseq
    %v222 = vshrl.u32 %v221, 7
    %v223 = vsub.s32 0, %v222
    %v224 = vrot.slane %v182, %v223
    %vm225 = vcmask 64512
    %v227 = vsel %vm225, %v219, 0
    %vm229 = vcmask 1043456
    %v231 = vsel %vm229, %v220, 0
    %233 = vmatprep.subr.bf16.mxu0 0
    %234 = vmatpush1.bf16.msra.mxu0 0
    %235 = vmatprep.subr.bf16.mxu0 0
    %236 = vmatpush1.bf16.msra.mxu0 0
    %237 = vmatprep.subr.bf16.mxu0 0
    %238 = vmatpush1.bf16.msra.mxu0 0
    %239 = vmatprep.subr.bf16.mxu0 0
    %240 = vmatpush1.bf16.msra.mxu0 0
    %241 = vmatprep.subr.bf16.mxu0 0
    %242 = vmatpush1.bf16.msra.mxu0 0
    %243 = vmatprep.subr.bf16.mxu0 0
    %244 = vmatpush1.bf16.msra.mxu0 0
    %245 = vmatprep.subr.bf16.mxu0 0
    %246 = vmatpush1.bf16.msra.mxu0 0
    %247 = vmatprep.subr.bf16.mxu0 0
    %248 = vmatpush1.bf16.msra.mxu0 %v231
    %249 = vmatprep.subr.bf16.mxu0 0
    %250 = vmatpush2.bf16.msra.mxu0 0
    %251 = vmatprep.subr.bf16.mxu0 0
    %252 = vmatpush2.bf16.msra.mxu0 0
    %253 = vmatprep.subr.bf16.mxu0 0
    %254 = vmatpush2.bf16.msra.mxu0 0
    %255 = vmatprep.subr.bf16.mxu0 0
    %256 = vmatpush2.bf16.msra.mxu0 0
    %257 = vmatprep.subr.bf16.mxu0 0
    %258 = vmatpush2.bf16.msra.mxu0 0
    %259 = vmatprep.subr.bf16.mxu0 0
    %260 = vmatpush2.bf16.msra.mxu0 0
    %261 = vmatprep.subr.bf16.mxu0 0
    %262 = vmatpush2.bf16.msra.mxu0 0
    %263 = vmatprep.subr.bf16.mxu0 0
    %264 = vmatpush2.bf16.msra.mxu0 0
    %265 = vmatprep.mubr.bf16.mxu0 0
    %266 = vmatmul.mubr.bf16.gmra.mxu0 %v227
    %v267 = vpop.f32.mrf.mxu0
    %v268 = vadd.f32 %v224, %v267
    %v269 = vpop.f32.mrf.mxu0
    %v270 = vpop.f32.mrf.mxu0
    %v271 = vpop.f32.mrf.mxu0
    %272 = vdwg.mxu0
    %v273 = vsel %vm225, %v268, -inf
    %274 = vmax.xlane.f32.xlu0 %v273
    %v275 = vpop.xlane.xlu0 %274
    %v276 = vsub.f32 %v268, %v275
    %v277 = vmul.f32 %v276, 1.442695
    %v278 = vpow.pop %v277
    %v279 = vsel %vm225, %v278, 0.0
    %280 = vadd.xlane.f32.xlu0 %v279
    %v281 = vpop.xlane.xlu0 %280
    %v282 = vrcp.pop %v281
    %v283 = vmul.f32 %v278, %v282
    %v284 = vpack.c.bf16 %v283, %v283
    %286 = vrot.lane.b32.xlu0 %v219, 64
    %v287 = vpop.permute.xlu0 %286
    %v289 = vsel %vm225, %v284, 0
    %v292 = vsel %vm229, %v287, 0
    %294 = vmatprep.subr.bf16.mxu0 0
    %295 = vmatpush1.bf16.msra.mxu0 0
    %296 = vmatprep.subr.bf16.mxu0 0
    %297 = vmatpush1.bf16.msra.mxu0 0
    %298 = vmatprep.subr.bf16.mxu0 0
    %299 = vmatpush1.bf16.msra.mxu0 0
    %300 = vmatprep.subr.bf16.mxu0 0
    %301 = vmatpush1.bf16.msra.mxu0 0
    %302 = vmatprep.subr.bf16.mxu0 0
    %303 = vmatpush1.bf16.msra.mxu0 0
    %304 = vmatprep.subr.bf16.mxu0 0
    %305 = vmatpush1.bf16.msra.mxu0 0
    %306 = vmatprep.subr.bf16.mxu0 0
    %307 = vmatpush1.bf16.msra.mxu0 0
    %308 = vmatprep.subr.bf16.mxu0 0
    %309 = vmatpush1.bf16.msra.mxu0 %v292
    %310 = vmatprep.subr.bf16.mxu0 0
    %311 = vmatpush2.bf16.msra.mxu0 0
    %312 = vmatprep.subr.bf16.mxu0 0
    %313 = vmatpush2.bf16.msra.mxu0 0
    %314 = vmatprep.subr.bf16.mxu0 0
    %315 = vmatpush2.bf16.msra.mxu0 0
    %316 = vmatprep.subr.bf16.mxu0 0
    %317 = vmatpush2.bf16.msra.mxu0 0
    %318 = vmatprep.subr.bf16.mxu0 0
    %319 = vmatpush2.bf16.msra.mxu0 0
    %320 = vmatprep.subr.bf16.mxu0 0
    %321 = vmatpush2.bf16.msra.mxu0 0
    %322 = vmatprep.subr.bf16.mxu0 0
    %323 = vmatpush2.bf16.msra.mxu0 0
    %324 = vmatprep.subr.bf16.mxu0 0
    %325 = vmatpush2.bf16.msra.mxu0 0
    %326 = vmatprep.mubr.bf16.mxu0 0
    %327 = vmatmul.mubr.bf16.gmra.mxu0 %v289
    %v328 = vpop.f32.mrf.mxu0
    %v329 = vadd.f32 0.0, %v328
    %v330 = vpop.f32.mrf.mxu0
    %v331 = vpop.f32.mrf.mxu0
    %v332 = vpop.f32.mrf.mxu0
    %333 = vdwg.mxu0
    %334 = vst.msk [vmem:[#allocation2] sm:$0xff] %vm225, %v329
    %335 = vrot.lane.b32.xlu0 %v176, 88
    %v336 = vpop.permute.xlu0 %335
    %338 = vxpose.xlu0.b32.start [1/16] %v336, 128
    %339 = vxpose.xlu0.b32.cont [2/16] 0.0, 128
    %340 = vxpose.xlu0.b32.cont [3/16] 0.0, 128
    %341 = vxpose.xlu0.b32.cont [4/16] 0.0, 128
    %342 = vxpose.xlu0.b32.cont [5/16] 0.0, 128
    %343 = vxpose.xlu0.b32.cont [6/16] 0.0, 128
    %344 = vxpose.xlu0.b32.cont [7/16] 0.0, 128
    %345 = vxpose.xlu0.b32.cont [8/16] 0.0, 128
    %346 = vxpose.xlu0.b32.cont [9/16] 0.0, 128
    %347 = vxpose.xlu0.b32.cont [10/16] 0.0, 128
    %348 = vxpose.xlu0.b32.cont [11/16] 0.0, 128
    %349 = vxpose.xlu0.b32.cont [12/16] 0.0, 128
    %350 = vxpose.xlu0.b32.cont [13/16] 0.0, 128
    %351 = vxpose.xlu0.b32.cont [14/16] 0.0, 128
    %352 = vxpose.xlu0.b32.cont [15/16] 0.0, 128
    %353 = vxpose.xlu0.b32.end [16/16] 0.0, 128
    %v354 = vpop.trf.xlu0
    %v355 = vpop.trf.xlu0
    %v356 = vpop.trf.xlu0
    %v357 = vpop.trf.xlu0
    %v358 = vpop.trf.xlu0
    %v359 = vpop.trf.xlu0
    %v360 = vpop.trf.xlu0
    %v361 = vpop.trf.xlu0
    %v362 = vpop.trf.xlu0
    %v363 = vpop.trf.xlu0
    %v364 = vpop.trf.xlu0
    %v365 = vpop.trf.xlu0
    %v366 = vpop.trf.xlu0
    %v367 = vpop.trf.xlu0
    %v368 = vpop.trf.xlu0
    %v369 = vpop.trf.xlu0
    %v370 = vpack.c.bf16 %v354, %v354
    %371 = vrot.lane.b32.xlu0 %v219, 120
    %v372 = vpop.permute.xlu0 %371
    %v374 = vsel %vm225, %v372, 0
    %v377 = vsel %vm229, %v370, 0
    %379 = vmatprep.subr.bf16.mxu0 0
    %380 = vmatpush1.bf16.msra.mxu0 0
    %381 = vmatprep.subr.bf16.mxu0 0
    %382 = vmatpush1.bf16.msra.mxu0 0
    %383 = vmatprep.subr.bf16.mxu0 0
    %384 = vmatpush1.bf16.msra.mxu0 0
    %385 = vmatprep.subr.bf16.mxu0 0
    %386 = vmatpush1.bf16.msra.mxu0 0
    %387 = vmatprep.subr.bf16.mxu0 0
    %388 = vmatpush1.bf16.msra.mxu0 0
    %389 = vmatprep.subr.bf16.mxu0 0
    %390 = vmatpush1.bf16.msra.mxu0 0
    %391 = vmatprep.subr.bf16.mxu0 0
    %392 = vmatpush1.bf16.msra.mxu0 0
    %393 = vmatprep.subr.bf16.mxu0 0
    %394 = vmatpush1.bf16.msra.mxu0 %v377
    %395 = vmatprep.subr.bf16.mxu0 0
    %396 = vmatpush2.bf16.msra.mxu0 0
    %397 = vmatprep.subr.bf16.mxu0 0
    %398 = vmatpush2.bf16.msra.mxu0 0
    %399 = vmatprep.subr.bf16.mxu0 0
    %400 = vmatpush2.bf16.msra.mxu0 0
    %401 = vmatprep.subr.bf16.mxu0 0
    %402 = vmatpush2.bf16.msra.mxu0 0
    %403 = vmatprep.subr.bf16.mxu0 0
    %404 = vmatpush2.bf16.msra.mxu0 0
    %405 = vmatprep.subr.bf16.mxu0 0
    %406 = vmatpush2.bf16.msra.mxu0 0
    %407 = vmatprep.subr.bf16.mxu0 0
    %408 = vmatpush2.bf16.msra.mxu0 0
    %409 = vmatprep.subr.bf16.mxu0 0
    %410 = vmatpush2.bf16.msra.mxu0 0
    %411 = vmatprep.mubr.bf16.mxu0 0
    %412 = vmatmul.mubr.bf16.gmra.mxu0 %v374
    %v413 = vpop.f32.mrf.mxu0
    %v414 = vadd.f32 %v224, %v413
    %v415 = vpop.f32.mrf.mxu0
    %v416 = vpop.f32.mrf.mxu0
    %v417 = vpop.f32.mrf.mxu0
    %418 = vdwg.mxu0
    %v419 = vsel %vm225, %v414, -inf
    %420 = vmax.xlane.f32.xlu0 %v419
    %v421 = vpop.xlane.xlu0 %420
    %v422 = vsub.f32 %v414, %v421
    %v423 = vmul.f32 %v422, 1.442695
    %v424 = vpow.pop %v423
    %v425 = vsel %vm225, %v424, 0.0
    %426 = vadd.xlane.f32.xlu0 %v425
    %v427 = vpop.xlane.xlu0 %426
    %v428 = vrcp.pop %v427
    %v429 = vmul.f32 %v424, %v428
    %v430 = vpack.c.bf16 %v429, %v429
    %431 = vrot.lane.b32.xlu0 %v219, 56
    %v432 = vpop.permute.xlu0 %431
    %v434 = vsel %vm225, %v430, 0
    %v437 = vsel %vm229, %v432, 0
    %439 = vmatprep.subr.bf16.mxu0 0
    %440 = vmatpush1.bf16.msra.mxu0 0
    %441 = vmatprep.subr.bf16.mxu0 0
    %442 = vmatpush1.bf16.msra.mxu0 0
    %443 = vmatprep.subr.bf16.mxu0 0
    %444 = vmatpush1.bf16.msra.mxu0 0
    %445 = vmatprep.subr.bf16.mxu0 0
    %446 = vmatpush1.bf16.msra.mxu0 0
    %447 = vmatprep.subr.bf16.mxu0 0
    %448 = vmatpush1.bf16.msra.mxu0 0
    %449 = vmatprep.subr.bf16.mxu0 0
    %450 = vmatpush1.bf16.msra.mxu0 0
    %451 = vmatprep.subr.bf16.mxu0 0
    %452 = vmatpush1.bf16.msra.mxu0 0
    %453 = vmatprep.subr.bf16.mxu0 0
    %454 = vmatpush1.bf16.msra.mxu0 %v437
    %455 = vmatprep.subr.bf16.mxu0 0
    %456 = vmatpush2.bf16.msra.mxu0 0
    %457 = vmatprep.subr.bf16.mxu0 0
    %458 = vmatpush2.bf16.msra.mxu0 0
    %459 = vmatprep.subr.bf16.mxu0 0
    %460 = vmatpush2.bf16.msra.mxu0 0
    %461 = vmatprep.subr.bf16.mxu0 0
    %462 = vmatpush2.bf16.msra.mxu0 0
    %463 = vmatprep.subr.bf16.mxu0 0
    %464 = vmatpush2.bf16.msra.mxu0 0
    %465 = vmatprep.subr.bf16.mxu0 0
    %466 = vmatpush2.bf16.msra.mxu0 0
    %467 = vmatprep.subr.bf16.mxu0 0
    %468 = vmatpush2.bf16.msra.mxu0 0
    %469 = vmatprep.subr.bf16.mxu0 0
    %470 = vmatpush2.bf16.msra.mxu0 0
    %471 = vmatprep.mubr.bf16.mxu0 0
    %472 = vmatmul.mubr.bf16.gmra.mxu0 %v434
    %v473 = vpop.f32.mrf.mxu0
    %v474 = vadd.f32 0.0, %v473
    %v475 = vpop.f32.mrf.mxu0
    %v476 = vpop.f32.mrf.mxu0
    %v477 = vpop.f32.mrf.mxu0
    %478 = vdwg.mxu0
    %480 = vrot.lane.b32.xlu0 %v474, 8
    %v481 = vpop.permute.xlu0 %480
    %vm483 = vcmask 130112
    %484 = vst.msk [vmem:[#allocation2] sm:$0xff] %vm483, %v481
    %485 = vrot.lane.b32.xlu0 %v176, 80
    %v486 = vpop.permute.xlu0 %485
    %488 = vxpose.xlu0.b32.start [1/16] %v486, 128
    %489 = vxpose.xlu0.b32.cont [2/16] 0.0, 128
    %490 = vxpose.xlu0.b32.cont [3/16] 0.0, 128
    %491 = vxpose.xlu0.b32.cont [4/16] 0.0, 128
    %492 = vxpose.xlu0.b32.cont [5/16] 0.0, 128
    %493 = vxpose.xlu0.b32.cont [6/16] 0.0, 128
    %494 = vxpose.xlu0.b32.cont [7/16] 0.0, 128
    %495 = vxpose.xlu0.b32.cont [8/16] 0.0, 128
    %496 = vxpose.xlu0.b32.cont [9/16] 0.0, 128
    %497 = vxpose.xlu0.b32.cont [10/16] 0.0, 128
    %498 = vxpose.xlu0.b32.cont [11/16] 0.0, 128
    %499 = vxpose.xlu0.b32.cont [12/16] 0.0, 128
    %500 = vxpose.xlu0.b32.cont [13/16] 0.0, 128
    %501 = vxpose.xlu0.b32.cont [14/16] 0.0, 128
    %502 = vxpose.xlu0.b32.cont [15/16] 0.0, 128
    %503 = vxpose.xlu0.b32.end [16/16] 0.0, 128
    %v504 = vpop.trf.xlu0
    %v505 = vpop.trf.xlu0
    %v506 = vpop.trf.xlu0
    %v507 = vpop.trf.xlu0
    %v508 = vpop.trf.xlu0
    %v509 = vpop.trf.xlu0
    %v510 = vpop.trf.xlu0
    %v511 = vpop.trf.xlu0
    %v512 = vpop.trf.xlu0
    %v513 = vpop.trf.xlu0
    %v514 = vpop.trf.xlu0
    %v515 = vpop.trf.xlu0
    %v516 = vpop.trf.xlu0
    %v517 = vpop.trf.xlu0
    %v518 = vpop.trf.xlu0
    %v519 = vpop.trf.xlu0
    %v520 = vpack.c.bf16 %v504, %v504
    %521 = vrot.lane.b32.xlu0 %v219, 112
    %v522 = vpop.permute.xlu0 %521
    %v524 = vsel %vm225, %v522, 0
    %v527 = vsel %vm229, %v520, 0
    %529 = vmatprep.subr.bf16.mxu0 0
    %530 = vmatpush1.bf16.msra.mxu0 0
    %531 = vmatprep.subr.bf16.mxu0 0
    %532 = vmatpush1.bf16.msra.mxu0 0
    %533 = vmatprep.subr.bf16.mxu0 0
    %534 = vmatpush1.bf16.msra.mxu0 0
    %535 = vmatprep.subr.bf16.mxu0 0
    %536 = vmatpush1.bf16.msra.mxu0 0
    %537 = vmatprep.subr.bf16.mxu0 0
    %538 = vmatpush1.bf16.msra.mxu0 0
    %539 = vmatprep.subr.bf16.mxu0 0
    %540 = vmatpush1.bf16.msra.mxu0 0
    %541 = vmatprep.subr.bf16.mxu0 0
    %542 = vmatpush1.bf16.msra.mxu0 0
    %543 = vmatprep.subr.bf16.mxu0 0
    %544 = vmatpush1.bf16.msra.mxu0 %v527
    %545 = vmatprep.subr.bf16.mxu0 0
    %546 = vmatpush2.bf16.msra.mxu0 0
    %547 = vmatprep.subr.bf16.mxu0 0
    %548 = vmatpush2.bf16.msra.mxu0 0
    %549 = vmatprep.subr.bf16.mxu0 0
    %550 = vmatpush2.bf16.msra.mxu0 0
    %551 = vmatprep.subr.bf16.mxu0 0
    %552 = vmatpush2.bf16.msra.mxu0 0
    %553 = vmatprep.subr.bf16.mxu0 0
    %554 = vmatpush2.bf16.msra.mxu0 0
    %555 = vmatprep.subr.bf16.mxu0 0
    %556 = vmatpush2.bf16.msra.mxu0 0
    %557 = vmatprep.subr.bf16.mxu0 0
    %558 = vmatpush2.bf16.msra.mxu0 0
    %559 = vmatprep.subr.bf16.mxu0 0
    %560 = vmatpush2.bf16.msra.mxu0 0
    %561 = vmatprep.mubr.bf16.mxu0 0
    %562 = vmatmul.mubr.bf16.gmra.mxu0 %v524
    %v563 = vpop.f32.mrf.mxu0
    %v564 = vadd.f32 %v224, %v563
    %v565 = vpop.f32.mrf.mxu0
    %v566 = vpop.f32.mrf.mxu0
    %v567 = vpop.f32.mrf.mxu0
    %568 = vdwg.mxu0
    %v569 = vsel %vm225, %v564, -inf
    %570 = vmax.xlane.f32.xlu0 %v569
    %v571 = vpop.xlane.xlu0 %570
    %v572 = vsub.f32 %v564, %v571
    %v573 = vmul.f32 %v572, 1.442695
    %v574 = vpow.pop %v573
    %v575 = vsel %vm225, %v574, 0.0
    %576 = vadd.xlane.f32.xlu0 %v575
    %v577 = vpop.xlane.xlu0 %576
    %v578 = vrcp.pop %v577
    %v579 = vmul.f32 %v574, %v578
    %v580 = vpack.c.bf16 %v579, %v579
    %581 = vrot.lane.b32.xlu0 %v219, 48
    %v582 = vpop.permute.xlu0 %581
    %v584 = vsel %vm225, %v580, 0
    %v587 = vsel %vm229, %v582, 0
    %589 = vmatprep.subr.bf16.mxu0 0
    %590 = vmatpush1.bf16.msra.mxu0 0
    %591 = vmatprep.subr.bf16.mxu0 0
    %592 = vmatpush1.bf16.msra.mxu0 0
    %593 = vmatprep.subr.bf16.mxu0 0
    %594 = vmatpush1.bf16.msra.mxu0 0
    %595 = vmatprep.subr.bf16.mxu0 0
    %596 = vmatpush1.bf16.msra.mxu0 0
    %597 = vmatprep.subr.bf16.mxu0 0
    %598 = vmatpush1.bf16.msra.mxu0 0
    %599 = vmatprep.subr.bf16.mxu0 0
    %600 = vmatpush1.bf16.msra.mxu0 0
    %601 = vmatprep.subr.bf16.mxu0 0
    %602 = vmatpush1.bf16.msra.mxu0 0
    %603 = vmatprep.subr.bf16.mxu0 0
    %604 = vmatpush1.bf16.msra.mxu0 %v587
    %605 = vmatprep.subr.bf16.mxu0 0
    %606 = vmatpush2.bf16.msra.mxu0 0
    %607 = vmatprep.subr.bf16.mxu0 0
    %608 = vmatpush2.bf16.msra.mxu0 0
    %609 = vmatprep.subr.bf16.mxu0 0
    %610 = vmatpush2.bf16.msra.mxu0 0
    %611 = vmatprep.subr.bf16.mxu0 0
    %612 = vmatpush2.bf16.msra.mxu0 0
    %613 = vmatprep.subr.bf16.mxu0 0
    %614 = vmatpush2.bf16.msra.mxu0 0
    %615 = vmatprep.subr.bf16.mxu0 0
    %616 = vmatpush2.bf16.msra.mxu0 0
    %617 = vmatprep.subr.bf16.mxu0 0
    %618 = vmatpush2.bf16.msra.mxu0 0
    %619 = vmatprep.subr.bf16.mxu0 0
    %620 = vmatpush2.bf16.msra.mxu0 0
    %621 = vmatprep.mubr.bf16.mxu0 0
    %622 = vmatmul.mubr.bf16.gmra.mxu0 %v584
    %v623 = vpop.f32.mrf.mxu0
    %v624 = vadd.f32 0.0, %v623
    %v625 = vpop.f32.mrf.mxu0
    %v626 = vpop.f32.mrf.mxu0
    %v627 = vpop.f32.mrf.mxu0
    %628 = vdwg.mxu0
    %630 = vrot.lane.b32.xlu0 %v624, 16
    %v631 = vpop.permute.xlu0 %630
    %vm633 = vcmask 195712
    %634 = vst.msk [vmem:[#allocation2] sm:$0xff] %vm633, %v631
    %635 = vrot.lane.b32.xlu0 %v176, 72
    %v636 = vpop.permute.xlu0 %635
    %638 = vxpose.xlu0.b32.start [1/16] %v636, 128
    %639 = vxpose.xlu0.b32.cont [2/16] 0.0, 128
    %640 = vxpose.xlu0.b32.cont [3/16] 0.0, 128
    %641 = vxpose.xlu0.b32.cont [4/16] 0.0, 128
    %642 = vxpose.xlu0.b32.cont [5/16] 0.0, 128
    %643 = vxpose.xlu0.b32.cont [6/16] 0.0, 128
    %644 = vxpose.xlu0.b32.cont [7/16] 0.0, 128
    %645 = vxpose.xlu0.b32.cont [8/16] 0.0, 128
    %646 = vxpose.xlu0.b32.cont [9/16] 0.0, 128
    %647 = vxpose.xlu0.b32.cont [10/16] 0.0, 128
    %648 = vxpose.xlu0.b32.cont [11/16] 0.0, 128
    %649 = vxpose.xlu0.b32.cont [12/16] 0.0, 128
    %650 = vxpose.xlu0.b32.cont [13/16] 0.0, 128
    %651 = vxpose.xlu0.b32.cont [14/16] 0.0, 128
    %652 = vxpose.xlu0.b32.cont [15/16] 0.0, 128
    %653 = vxpose.xlu0.b32.end [16/16] 0.0, 128
    %v654 = vpop.trf.xlu0
    %v655 = vpop.trf.xlu0
    %v656 = vpop.trf.xlu0
    %v657 = vpop.trf.xlu0
    %v658 = vpop.trf.xlu0
    %v659 = vpop.trf.xlu0
    %v660 = vpop.trf.xlu0
    %v661 = vpop.trf.xlu0
    %v662 = vpop.trf.xlu0
    %v663 = vpop.trf.xlu0
    %v664 = vpop.trf.xlu0
    %v665 = vpop.trf.xlu0
    %v666 = vpop.trf.xlu0
    %v667 = vpop.trf.xlu0
    %v668 = vpop.trf.xlu0
    %v669 = vpop.trf.xlu0
    %v670 = vpack.c.bf16 %v654, %v654
    %671 = vrot.lane.b32.xlu0 %v219, 104
    %v672 = vpop.permute.xlu0 %671
    %v674 = vsel %vm225, %v672, 0
    %v677 = vsel %vm229, %v670, 0
    %679 = vmatprep.subr.bf16.mxu0 0
    %680 = vmatpush1.bf16.msra.mxu0 0
    %681 = vmatprep.subr.bf16.mxu0 0
    %682 = vmatpush1.bf16.msra.mxu0 0
    %683 = vmatprep.subr.bf16.mxu0 0
    %684 = vmatpush1.bf16.msra.mxu0 0
    %685 = vmatprep.subr.bf16.mxu0 0
    %686 = vmatpush1.bf16.msra.mxu0 0
    %687 = vmatprep.subr.bf16.mxu0 0
    %688 = vmatpush1.bf16.msra.mxu0 0
    %689 = vmatprep.subr.bf16.mxu0 0
    %690 = vmatpush1.bf16.msra.mxu0 0
    %691 = vmatprep.subr.bf16.mxu0 0
    %692 = vmatpush1.bf16.msra.mxu0 0
    %693 = vmatprep.subr.bf16.mxu0 0
    %694 = vmatpush1.bf16.msra.mxu0 %v677
    %695 = vmatprep.subr.bf16.mxu0 0
    %696 = vmatpush2.bf16.msra.mxu0 0
    %697 = vmatprep.subr.bf16.mxu0 0
    %698 = vmatpush2.bf16.msra.mxu0 0
    %699 = vmatprep.subr.bf16.mxu0 0
    %700 = vmatpush2.bf16.msra.mxu0 0
    %701 = vmatprep.subr.bf16.mxu0 0
    %702 = vmatpush2.bf16.msra.mxu0 0
    %703 = vmatprep.subr.bf16.mxu0 0
    %704 = vmatpush2.bf16.msra.mxu0 0
    %705 = vmatprep.subr.bf16.mxu0 0
    %706 = vmatpush2.bf16.msra.mxu0 0
    %707 = vmatprep.subr.bf16.mxu0 0
    %708 = vmatpush2.bf16.msra.mxu0 0
    %709 = vmatprep.subr.bf16.mxu0 0
    %710 = vmatpush2.bf16.msra.mxu0 0
    %711 = vmatprep.mubr.bf16.mxu0 0
    %712 = vmatmul.mubr.bf16.gmra.mxu0 %v674
    %v713 = vpop.f32.mrf.mxu0
    %v714 = vadd.f32 %v224, %v713
    %v715 = vpop.f32.mrf.mxu0
    %v716 = vpop.f32.mrf.mxu0
    %v717 = vpop.f32.mrf.mxu0
    %718 = vdwg.mxu0
    %v719 = vsel %vm225, %v714, -inf
    %720 = vmax.xlane.f32.xlu0 %v719
    %v721 = vpop.xlane.xlu0 %720
    %v722 = vsub.f32 %v714, %v721
    %v723 = vmul.f32 %v722, 1.442695
    %v724 = vpow.pop %v723
    %v725 = vsel %vm225, %v724, 0.0
    %726 = vadd.xlane.f32.xlu0 %v725
    %v727 = vpop.xlane.xlu0 %726
    %v728 = vrcp.pop %v727
    %v729 = vmul.f32 %v724, %v728
    %v730 = vpack.c.bf16 %v729, %v729
    %731 = vrot.lane.b32.xlu0 %v219, 40
    %v732 = vpop.permute.xlu0 %731
    %v734 = vsel %vm225, %v730, 0
    %v737 = vsel %vm229, %v732, 0
    %739 = vmatprep.subr.bf16.mxu0 0
    %740 = vmatpush1.bf16.msra.mxu0 0
    %741 = vmatprep.subr.bf16.mxu0 0
    %742 = vmatpush1.bf16.msra.mxu0 0
    %743 = vmatprep.subr.bf16.mxu0 0
    %744 = vmatpush1.bf16.msra.mxu0 0
    %745 = vmatprep.subr.bf16.mxu0 0
    %746 = vmatpush1.bf16.msra.mxu0 0
    %747 = vmatprep.subr.bf16.mxu0 0
    %748 = vmatpush1.bf16.msra.mxu0 0
    %749 = vmatprep.subr.bf16.mxu0 0
    %750 = vmatpush1.bf16.msra.mxu0 0
    %751 = vmatprep.subr.bf16.mxu0 0
    %752 = vmatpush1.bf16.msra.mxu0 0
    %753 = vmatprep.subr.bf16.mxu0 0
    %754 = vmatpush1.bf16.msra.mxu0 %v737
    %755 = vmatprep.subr.bf16.mxu0 0
    %756 = vmatpush2.bf16.msra.mxu0 0
    %757 = vmatprep.subr.bf16.mxu0 0
    %758 = vmatpush2.bf16.msra.mxu0 0
    %759 = vmatprep.subr.bf16.mxu0 0
    %760 = vmatpush2.bf16.msra.mxu0 0
    %761 = vmatprep.subr.bf16.mxu0 0
    %762 = vmatpush2.bf16.msra.mxu0 0
    %763 = vmatprep.subr.bf16.mxu0 0
    %764 = vmatpush2.bf16.msra.mxu0 0
    %765 = vmatprep.subr.bf16.mxu0 0
    %766 = vmatpush2.bf16.msra.mxu0 0
    %767 = vmatprep.subr.bf16.mxu0 0
    %768 = vmatpush2.bf16.msra.mxu0 0
    %769 = vmatprep.subr.bf16.mxu0 0
    %770 = vmatpush2.bf16.msra.mxu0 0
    %771 = vmatprep.mubr.bf16.mxu0 0
    %772 = vmatmul.mubr.bf16.gmra.mxu0 %v734
    %v773 = vpop.f32.mrf.mxu0
    %v774 = vadd.f32 0.0, %v773
    %v775 = vpop.f32.mrf.mxu0
    %v776 = vpop.f32.mrf.mxu0
    %v777 = vpop.f32.mrf.mxu0
    %778 = vdwg.mxu0
    %780 = vrot.lane.b32.xlu0 %v774, 24
    %v781 = vpop.permute.xlu0 %780
    %vm783 = vcmask 261312
    %784 = vst.msk [vmem:[#allocation2] sm:$0xff] %vm783, %v781
    %786 = vrot.lane.b32.xlu0 %v179, 96
    %v787 = vpop.permute.xlu0 %786
    %789 = vxpose.xlu0.b32.start [1/16] %v787, 128
    %790 = vxpose.xlu0.b32.cont [2/16] 0.0, 128
    %791 = vxpose.xlu0.b32.cont [3/16] 0.0, 128
    %792 = vxpose.xlu0.b32.cont [4/16] 0.0, 128
    %793 = vxpose.xlu0.b32.cont [5/16] 0.0, 128
    %794 = vxpose.xlu0.b32.cont [6/16] 0.0, 128
    %795 = vxpose.xlu0.b32.cont [7/16] 0.0, 128
    %796 = vxpose.xlu0.b32.cont [8/16] 0.0, 128
    %797 = vxpose.xlu0.b32.cont [9/16] 0.0, 128
    %798 = vxpose.xlu0.b32.cont [10/16] 0.0, 128
    %799 = vxpose.xlu0.b32.cont [11/16] 0.0, 128
    %800 = vxpose.xlu0.b32.cont [12/16] 0.0, 128
    %801 = vxpose.xlu0.b32.cont [13/16] 0.0, 128
    %802 = vxpose.xlu0.b32.cont [14/16] 0.0, 128
    %803 = vxpose.xlu0.b32.cont [15/16] 0.0, 128
    %804 = vxpose.xlu0.b32.end [16/16] 0.0, 128
    %v805 = vpop.trf.xlu0
    %v806 = vpop.trf.xlu0
    %v807 = vpop.trf.xlu0
    %v808 = vpop.trf.xlu0
    %v809 = vpop.trf.xlu0
    %v810 = vpop.trf.xlu0
    %v811 = vpop.trf.xlu0
    %v812 = vpop.trf.xlu0
    %v813 = vpop.trf.xlu0
    %v814 = vpop.trf.xlu0
    %v815 = vpop.trf.xlu0
    %v816 = vpop.trf.xlu0
    %v817 = vpop.trf.xlu0
    %v818 = vpop.trf.xlu0
    %v819 = vpop.trf.xlu0
    %v820 = vpop.trf.xlu0
    %v821 = vpack.c.bf16 %v179, %v179
    %v822 = vpack.c.bf16 %v805, %v805
    %v823 = vlaneseq
    %v824 = vshrl.u32 %v823, 7
    %v825 = vsub.s32 1, %v824
    %v826 = vrot.slane %v182, %v825
    %v828 = vsel %vm225, %v821, 0
    %v831 = vsel %vm229, %v822, 0
    %833 = vmatprep.subr.bf16.mxu0 0
    %834 = vmatpush1.bf16.msra.mxu0 0
    %835 = vmatprep.subr.bf16.mxu0 0
    %836 = vmatpush1.bf16.msra.mxu0 0
    %837 = vmatprep.subr.bf16.mxu0 0
    %838 = vmatpush1.bf16.msra.mxu0 0
    %839 = vmatprep.subr.bf16.mxu0 0
    %840 = vmatpush1.bf16.msra.mxu0 0
    %841 = vmatprep.subr.bf16.mxu0 0
    %842 = vmatpush1.bf16.msra.mxu0 0
    %843 = vmatprep.subr.bf16.mxu0 0
    %844 = vmatpush1.bf16.msra.mxu0 0
    %845 = vmatprep.subr.bf16.mxu0 0
    %846 = vmatpush1.bf16.msra.mxu0 0
    %847 = vmatprep.subr.bf16.mxu0 0
    %848 = vmatpush1.bf16.msra.mxu0 %v831
    %849 = vmatprep.subr.bf16.mxu0 0
    %850 = vmatpush2.bf16.msra.mxu0 0
    %851 = vmatprep.subr.bf16.mxu0 0
    %852 = vmatpush2.bf16.msra.mxu0 0
    %853 = vmatprep.subr.bf16.mxu0 0
    %854 = vmatpush2.bf16.msra.mxu0 0
    %855 = vmatprep.subr.bf16.mxu0 0
    %856 = vmatpush2.bf16.msra.mxu0 0
    %857 = vmatprep.subr.bf16.mxu0 0
    %858 = vmatpush2.bf16.msra.mxu0 0
    %859 = vmatprep.subr.bf16.mxu0 0
    %860 = vmatpush2.bf16.msra.mxu0 0
    %861 = vmatprep.subr.bf16.mxu0 0
    %862 = vmatpush2.bf16.msra.mxu0 0
    %863 = vmatprep.subr.bf16.mxu0 0
    %864 = vmatpush2.bf16.msra.mxu0 0
    %865 = vmatprep.mubr.bf16.mxu0 0
    %866 = vmatmul.mubr.bf16.gmra.mxu0 %v828
    %v867 = vpop.f32.mrf.mxu0
    %v868 = vadd.f32 %v826, %v867
    %v869 = vpop.f32.mrf.mxu0
    %v870 = vpop.f32.mrf.mxu0
    %v871 = vpop.f32.mrf.mxu0
    %872 = vdwg.mxu0
    %v873 = vsel %vm225, %v868, -inf
    %874 = vmax.xlane.f32.xlu0 %v873
    %v875 = vpop.xlane.xlu0 %874
    %v876 = vsub.f32 %v868, %v875
    %v877 = vmul.f32 %v876, 1.442695
    %v878 = vpow.pop %v877
    %v879 = vsel %vm225, %v878, 0.0
    %880 = vadd.xlane.f32.xlu0 %v879
    %v881 = vpop.xlane.xlu0 %880
    %v882 = vrcp.pop %v881
    %v883 = vmul.f32 %v878, %v882
    %v884 = vpack.c.bf16 %v883, %v883
    %886 = vrot.lane.b32.xlu0 %v821, 64
    %v887 = vpop.permute.xlu0 %886
    %v889 = vsel %vm225, %v884, 0
    %v892 = vsel %vm229, %v887, 0
    %894 = vmatprep.subr.bf16.mxu0 0
    %895 = vmatpush1.bf16.msra.mxu0 0
    %896 = vmatprep.subr.bf16.mxu0 0
    %897 = vmatpush1.bf16.msra.mxu0 0
    %898 = vmatprep.subr.bf16.mxu0 0
    %899 = vmatpush1.bf16.msra.mxu0 0
    %900 = vmatprep.subr.bf16.mxu0 0
    %901 = vmatpush1.bf16.msra.mxu0 0
    %902 = vmatprep.subr.bf16.mxu0 0
    %903 = vmatpush1.bf16.msra.mxu0 0
    %904 = vmatprep.subr.bf16.mxu0 0
    %905 = vmatpush1.bf16.msra.mxu0 0
    %906 = vmatprep.subr.bf16.mxu0 0
    %907 = vmatpush1.bf16.msra.mxu0 0
    %908 = vmatprep.subr.bf16.mxu0 0
    %909 = vmatpush1.bf16.msra.mxu0 %v892
    %910 = vmatprep.subr.bf16.mxu0 0
    %911 = vmatpush2.bf16.msra.mxu0 0
    %912 = vmatprep.subr.bf16.mxu0 0
    %913 = vmatpush2.bf16.msra.mxu0 0
    %914 = vmatprep.subr.bf16.mxu0 0
    %915 = vmatpush2.bf16.msra.mxu0 0
    %916 = vmatprep.subr.bf16.mxu0 0
    %917 = vmatpush2.bf16.msra.mxu0 0
    %918 = vmatprep.subr.bf16.mxu0 0
    %919 = vmatpush2.bf16.msra.mxu0 0
    %920 = vmatprep.subr.bf16.mxu0 0
    %921 = vmatpush2.bf16.msra.mxu0 0
    %922 = vmatprep.subr.bf16.mxu0 0
    %923 = vmatpush2.bf16.msra.mxu0 0
    %924 = vmatprep.subr.bf16.mxu0 0
    %925 = vmatpush2.bf16.msra.mxu0 0
    %926 = vmatprep.mubr.bf16.mxu0 0
    %927 = vmatmul.mubr.bf16.gmra.mxu0 %v889
    %v928 = vpop.f32.mrf.mxu0
    %v929 = vadd.f32 0.0, %v928
    %v930 = vpop.f32.mrf.mxu0
    %v931 = vpop.f32.mrf.mxu0
    %v932 = vpop.f32.mrf.mxu0
    %933 = vdwg.mxu0
    %934 = vst.msk [vmem:[#allocation2 + $0x8] sm:$0xff] %vm225, %v929
    %935 = vrot.lane.b32.xlu0 %v179, 88
    %v936 = vpop.permute.xlu0 %935
    %938 = vxpose.xlu0.b32.start [1/16] %v936, 128
    %939 = vxpose.xlu0.b32.cont [2/16] 0.0, 128
    %940 = vxpose.xlu0.b32.cont [3/16] 0.0, 128
    %941 = vxpose.xlu0.b32.cont [4/16] 0.0, 128
    %942 = vxpose.xlu0.b32.cont [5/16] 0.0, 128
    %943 = vxpose.xlu0.b32.cont [6/16] 0.0, 128
    %944 = vxpose.xlu0.b32.cont [7/16] 0.0, 128
    %945 = vxpose.xlu0.b32.cont [8/16] 0.0, 128
    %946 = vxpose.xlu0.b32.cont [9/16] 0.0, 128
    %947 = vxpose.xlu0.b32.cont [10/16] 0.0, 128
    %948 = vxpose.xlu0.b32.cont [11/16] 0.0, 128
    %949 = vxpose.xlu0.b32.cont [12/16] 0.0, 128
    %950 = vxpose.xlu0.b32.cont [13/16] 0.0, 128
    %951 = vxpose.xlu0.b32.cont [14/16] 0.0, 128
    %952 = vxpose.xlu0.b32.cont [15/16] 0.0, 128
    %953 = vxpose.xlu0.b32.end [16/16] 0.0, 128
    %v954 = vpop.trf.xlu0
    %v955 = vpop.trf.xlu0
    %v956 = vpop.trf.xlu0
    %v957 = vpop.trf.xlu0
    %v958 = vpop.trf.xlu0
    %v959 = vpop.trf.xlu0
    %v960 = vpop.trf.xlu0
    %v961 = vpop.trf.xlu0
    %v962 = vpop.trf.xlu0
    %v963 = vpop.trf.xlu0
    %v964 = vpop.trf.xlu0
    %v965 = vpop.trf.xlu0
    %v966 = vpop.trf.xlu0
    %v967 = vpop.trf.xlu0
    %v968 = vpop.trf.xlu0
    %v969 = vpop.trf.xlu0
    %v970 = vpack.c.bf16 %v954, %v954
    %971 = vrot.lane.b32.xlu0 %v821, 120
    %v972 = vpop.permute.xlu0 %971
    %v974 = vsel %vm225, %v972, 0
    %v977 = vsel %vm229, %v970, 0
    %979 = vmatprep.subr.bf16.mxu0 0
    %980 = vmatpush1.bf16.msra.mxu0 0
    %981 = vmatprep.subr.bf16.mxu0 0
    %982 = vmatpush1.bf16.msra.mxu0 0
    %983 = vmatprep.subr.bf16.mxu0 0
    %984 = vmatpush1.bf16.msra.mxu0 0
    %985 = vmatprep.subr.bf16.mxu0 0
    %986 = vmatpush1.bf16.msra.mxu0 0
    %987 = vmatprep.subr.bf16.mxu0 0
    %988 = vmatpush1.bf16.msra.mxu0 0
    %989 = vmatprep.subr.bf16.mxu0 0
    %990 = vmatpush1.bf16.msra.mxu0 0
    %991 = vmatprep.subr.bf16.mxu0 0
    %992 = vmatpush1.bf16.msra.mxu0 0
    %993 = vmatprep.subr.bf16.mxu0 0
    %994 = vmatpush1.bf16.msra.mxu0 %v977
    %995 = vmatprep.subr.bf16.mxu0 0
    %996 = vmatpush2.bf16.msra.mxu0 0
    %997 = vmatprep.subr.bf16.mxu0 0
    %998 = vmatpush2.bf16.msra.mxu0 0
    %999 = vmatprep.subr.bf16.mxu0 0
    %1000 = vmatpush2.bf16.msra.mxu0 0
    %1001 = vmatprep.subr.bf16.mxu0 0
    %1002 = vmatpush2.bf16.msra.mxu0 0
    %1003 = vmatprep.subr.bf16.mxu0 0
    %1004 = vmatpush2.bf16.msra.mxu0 0
    %1005 = vmatprep.subr.bf16.mxu0 0
    %1006 = vmatpush2.bf16.msra.mxu0 0
    %1007 = vmatprep.subr.bf16.mxu0 0
    %1008 = vmatpush2.bf16.msra.mxu0 0
    %1009 = vmatprep.subr.bf16.mxu0 0
    %1010 = vmatpush2.bf16.msra.mxu0 0
    %1011 = vmatprep.mubr.bf16.mxu0 0
    %1012 = vmatmul.mubr.bf16.gmra.mxu0 %v974
    %v1013 = vpop.f32.mrf.mxu0
    %v1014 = vadd.f32 %v826, %v1013
    %v1015 = vpop.f32.mrf.mxu0
    %v1016 = vpop.f32.mrf.mxu0
    %v1017 = vpop.f32.mrf.mxu0
    %1018 = vdwg.mxu0
    %v1019 = vsel %vm225, %v1014, -inf
    %1020 = vmax.xlane.f32.xlu0 %v1019
    %v1021 = vpop.xlane.xlu0 %1020
    %v1022 = vsub.f32 %v1014, %v1021
    %v1023 = vmul.f32 %v1022, 1.442695
    %v1024 = vpow.pop %v1023
    %v1025 = vsel %vm225, %v1024, 0.0
    %1026 = vadd.xlane.f32.xlu0 %v1025
    %v1027 = vpop.xlane.xlu0 %1026
    %v1028 = vrcp.pop %v1027
    %v1029 = vmul.f32 %v1024, %v1028
    %v1030 = vpack.c.bf16 %v1029, %v1029
    %1031 = vrot.lane.b32.xlu0 %v821, 56
    %v1032 = vpop.permute.xlu0 %1031
    %v1034 = vsel %vm225, %v1030, 0
    %v1037 = vsel %vm229, %v1032, 0
    %1039 = vmatprep.subr.bf16.mxu0 0
    %1040 = vmatpush1.bf16.msra.mxu0 0
    %1041 = vmatprep.subr.bf16.mxu0 0
    %1042 = vmatpush1.bf16.msra.mxu0 0
    %1043 = vmatprep.subr.bf16.mxu0 0
    %1044 = vmatpush1.bf16.msra.mxu0 0
    %1045 = vmatprep.subr.bf16.mxu0 0
    %1046 = vmatpush1.bf16.msra.mxu0 0
    %1047 = vmatprep.subr.bf16.mxu0 0
    %1048 = vmatpush1.bf16.msra.mxu0 0
    %1049 = vmatprep.subr.bf16.mxu0 0
    %1050 = vmatpush1.bf16.msra.mxu0 0
    %1051 = vmatprep.subr.bf16.mxu0 0
    %1052 = vmatpush1.bf16.msra.mxu0 0
    %1053 = vmatprep.subr.bf16.mxu0 0
    %1054 = vmatpush1.bf16.msra.mxu0 %v1037
    %1055 = vmatprep.subr.bf16.mxu0 0
    %1056 = vmatpush2.bf16.msra.mxu0 0
    %1057 = vmatprep.subr.bf16.mxu0 0
    %1058 = vmatpush2.bf16.msra.mxu0 0
    %1059 = vmatprep.subr.bf16.mxu0 0
    %1060 = vmatpush2.bf16.msra.mxu0 0
    %1061 = vmatprep.subr.bf16.mxu0 0
    %1062 = vmatpush2.bf16.msra.mxu0 0
    %1063 = vmatprep.subr.bf16.mxu0 0
    %1064 = vmatpush2.bf16.msra.mxu0 0
    %1065 = vmatprep.subr.bf16.mxu0 0
    %1066 = vmatpush2.bf16.msra.mxu0 0
    %1067 = vmatprep.subr.bf16.mxu0 0
    %1068 = vmatpush2.bf16.msra.mxu0 0
    %1069 = vmatprep.subr.bf16.mxu0 0
    %1070 = vmatpush2.bf16.msra.mxu0 0
    %1071 = vmatprep.mubr.bf16.mxu0 0
    %1072 = vmatmul.mubr.bf16.gmra.mxu0 %v1034
    %v1073 = vpop.f32.mrf.mxu0
    %v1074 = vadd.f32 0.0, %v1073
    %v1075 = vpop.f32.mrf.mxu0
    %v1076 = vpop.f32.mrf.mxu0
    %v1077 = vpop.f32.mrf.mxu0
    %1078 = vdwg.mxu0
    %1080 = vrot.lane.b32.xlu0 %v1074, 8
    %v1081 = vpop.permute.xlu0 %1080
    %1083 = vst.msk [vmem:[#allocation2 + $0x8] sm:$0xff] %vm483, %v1081
    %1084 = vrot.lane.b32.xlu0 %v179, 80
    %v1085 = vpop.permute.xlu0 %1084
    %1087 = vxpose.xlu0.b32.start [1/16] %v1085, 128
    %1088 = vxpose.xlu0.b32.cont [2/16] 0.0, 128
    %1089 = vxpose.xlu0.b32.cont [3/16] 0.0, 128
    %1090 = vxpose.xlu0.b32.cont [4/16] 0.0, 128
    %1091 = vxpose.xlu0.b32.cont [5/16] 0.0, 128
    %1092 = vxpose.xlu0.b32.cont [6/16] 0.0, 128
    %1093 = vxpose.xlu0.b32.cont [7/16] 0.0, 128
    %1094 = vxpose.xlu0.b32.cont [8/16] 0.0, 128
    %1095 = vxpose.xlu0.b32.cont [9/16] 0.0, 128
    %1096 = vxpose.xlu0.b32.cont [10/16] 0.0, 128
    %1097 = vxpose.xlu0.b32.cont [11/16] 0.0, 128
    %1098 = vxpose.xlu0.b32.cont [12/16] 0.0, 128
    %1099 = vxpose.xlu0.b32.cont [13/16] 0.0, 128
    %1100 = vxpose.xlu0.b32.cont [14/16] 0.0, 128
    %1101 = vxpose.xlu0.b32.cont [15/16] 0.0, 128
    %1102 = vxpose.xlu0.b32.end [16/16] 0.0, 128
    %v1103 = vpop.trf.xlu0
    %v1104 = vpop.trf.xlu0
    %v1105 = vpop.trf.xlu0
    %v1106 = vpop.trf.xlu0
    %v1107 = vpop.trf.xlu0
    %v1108 = vpop.trf.xlu0
    %v1109 = vpop.trf.xlu0
    %v1110 = vpop.trf.xlu0
    %v1111 = vpop.trf.xlu0
    %v1112 = vpop.trf.xlu0
    %v1113 = vpop.trf.xlu0
    %v1114 = vpop.trf.xlu0
    %v1115 = vpop.trf.xlu0
    %v1116 = vpop.trf.xlu0
    %v1117 = vpop.trf.xlu0
    %v1118 = vpop.trf.xlu0
    %v1119 = vpack.c.bf16 %v1103, %v1103
    %1120 = vrot.lane.b32.xlu0 %v821, 112
    %v1121 = vpop.permute.xlu0 %1120
    %v1123 = vsel %vm225, %v1121, 0
    %v1126 = vsel %vm229, %v1119, 0
    %1128 = vmatprep.subr.bf16.mxu0 0
    %1129 = vmatpush1.bf16.msra.mxu0 0
    %1130 = vmatprep.subr.bf16.mxu0 0
    %1131 = vmatpush1.bf16.msra.mxu0 0
    %1132 = vmatprep.subr.bf16.mxu0 0
    %1133 = vmatpush1.bf16.msra.mxu0 0
    %1134 = vmatprep.subr.bf16.mxu0 0
    %1135 = vmatpush1.bf16.msra.mxu0 0
    %1136 = vmatprep.subr.bf16.mxu0 0
    %1137 = vmatpush1.bf16.msra.mxu0 0
    %1138 = vmatprep.subr.bf16.mxu0 0
    %1139 = vmatpush1.bf16.msra.mxu0 0
    %1140 = vmatprep.subr.bf16.mxu0 0
    %1141 = vmatpush1.bf16.msra.mxu0 0
    %1142 = vmatprep.subr.bf16.mxu0 0
    %1143 = vmatpush1.bf16.msra.mxu0 %v1126
    %1144 = vmatprep.subr.bf16.mxu0 0
    %1145 = vmatpush2.bf16.msra.mxu0 0
    %1146 = vmatprep.subr.bf16.mxu0 0
    %1147 = vmatpush2.bf16.msra.mxu0 0
    %1148 = vmatprep.subr.bf16.mxu0 0
    %1149 = vmatpush2.bf16.msra.mxu0 0
    %1150 = vmatprep.subr.bf16.mxu0 0
    %1151 = vmatpush2.bf16.msra.mxu0 0
    %1152 = vmatprep.subr.bf16.mxu0 0
    %1153 = vmatpush2.bf16.msra.mxu0 0
    %1154 = vmatprep.subr.bf16.mxu0 0
    %1155 = vmatpush2.bf16.msra.mxu0 0
    %1156 = vmatprep.subr.bf16.mxu0 0
    %1157 = vmatpush2.bf16.msra.mxu0 0
    %1158 = vmatprep.subr.bf16.mxu0 0
    %1159 = vmatpush2.bf16.msra.mxu0 0
    %1160 = vmatprep.mubr.bf16.mxu0 0
    %1161 = vmatmul.mubr.bf16.gmra.mxu0 %v1123
    %v1162 = vpop.f32.mrf.mxu0
    %v1163 = vadd.f32 %v826, %v1162
    %v1164 = vpop.f32.mrf.mxu0
    %v1165 = vpop.f32.mrf.mxu0
    %v1166 = vpop.f32.mrf.mxu0
    %1167 = vdwg.mxu0
    %v1168 = vsel %vm225, %v1163, -inf
    %1169 = vmax.xlane.f32.xlu0 %v1168
    %v1170 = vpop.xlane.xlu0 %1169
    %v1171 = vsub.f32 %v1163, %v1170
    %v1172 = vmul.f32 %v1171, 1.442695
    %v1173 = vpow.pop %v1172
    %v1174 = vsel %vm225, %v1173, 0.0
    %1175 = vadd.xlane.f32.xlu0 %v1174
    %v1176 = vpop.xlane.xlu0 %1175
    %v1177 = vrcp.pop %v1176
    %v1178 = vmul.f32 %v1173, %v1177
    %v1179 = vpack.c.bf16 %v1178, %v1178
    %1180 = vrot.lane.b32.xlu0 %v821, 48
    %v1181 = vpop.permute.xlu0 %1180
    %v1183 = vsel %vm225, %v1179, 0
    %v1186 = vsel %vm229, %v1181, 0
    %1188 = vmatprep.subr.bf16.mxu0 0
    %1189 = vmatpush1.bf16.msra.mxu0 0
    %1190 = vmatprep.subr.bf16.mxu0 0
    %1191 = vmatpush1.bf16.msra.mxu0 0
    %1192 = vmatprep.subr.bf16.mxu0 0
    %1193 = vmatpush1.bf16.msra.mxu0 0
    %1194 = vmatprep.subr.bf16.mxu0 0
    %1195 = vmatpush1.bf16.msra.mxu0 0
    %1196 = vmatprep.subr.bf16.mxu0 0
    %1197 = vmatpush1.bf16.msra.mxu0 0
    %1198 = vmatprep.subr.bf16.mxu0 0
    %1199 = vmatpush1.bf16.msra.mxu0 0
    %1200 = vmatprep.subr.bf16.mxu0 0
    %1201 = vmatpush1.bf16.msra.mxu0 0
    %1202 = vmatprep.subr.bf16.mxu0 0
    %1203 = vmatpush1.bf16.msra.mxu0 %v1186
    %1204 = vmatprep.subr.bf16.mxu0 0
    %1205 = vmatpush2.bf16.msra.mxu0 0
    %1206 = vmatprep.subr.bf16.mxu0 0
    %1207 = vmatpush2.bf16.msra.mxu0 0
    %1208 = vmatprep.subr.bf16.mxu0 0
    %1209 = vmatpush2.bf16.msra.mxu0 0
    %1210 = vmatprep.subr.bf16.mxu0 0
    %1211 = vmatpush2.bf16.msra.mxu0 0
    %1212 = vmatprep.subr.bf16.mxu0 0
    %1213 = vmatpush2.bf16.msra.mxu0 0
    %1214 = vmatprep.subr.bf16.mxu0 0
    %1215 = vmatpush2.bf16.msra.mxu0 0
    %1216 = vmatprep.subr.bf16.mxu0 0
    %1217 = vmatpush2.bf16.msra.mxu0 0
    %1218 = vmatprep.subr.bf16.mxu0 0
    %1219 = vmatpush2.bf16.msra.mxu0 0
    %1220 = vmatprep.mubr.bf16.mxu0 0
    %1221 = vmatmul.mubr.bf16.gmra.mxu0 %v1183
    %v1222 = vpop.f32.mrf.mxu0
    %v1223 = vadd.f32 0.0, %v1222
    %v1224 = vpop.f32.mrf.mxu0
    %v1225 = vpop.f32.mrf.mxu0
    %v1226 = vpop.f32.mrf.mxu0
    %1227 = vdwg.mxu0
    %1229 = vrot.lane.b32.xlu0 %v1223, 16
    %v1230 = vpop.permute.xlu0 %1229
    %1232 = vst.msk [vmem:[#allocation2 + $0x8] sm:$0xff] %vm633, %v1230
    %1233 = vrot.lane.b32.xlu0 %v179, 72
    %v1234 = vpop.permute.xlu0 %1233
    %1236 = vxpose.xlu0.b32.start [1/16] %v1234, 128
    %1237 = vxpose.xlu0.b32.cont [2/16] 0.0, 128
    %1238 = vxpose.xlu0.b32.cont [3/16] 0.0, 128
    %1239 = vxpose.xlu0.b32.cont [4/16] 0.0, 128
    %1240 = vxpose.xlu0.b32.cont [5/16] 0.0, 128
    %1241 = vxpose.xlu0.b32.cont [6/16] 0.0, 128
    %1242 = vxpose.xlu0.b32.cont [7/16] 0.0, 128
    %1243 = vxpose.xlu0.b32.cont [8/16] 0.0, 128
    %1244 = vxpose.xlu0.b32.cont [9/16] 0.0, 128
    %1245 = vxpose.xlu0.b32.cont [10/16] 0.0, 128
    %1246 = vxpose.xlu0.b32.cont [11/16] 0.0, 128
    %1247 = vxpose.xlu0.b32.cont [12/16] 0.0, 128
    %1248 = vxpose.xlu0.b32.cont [13/16] 0.0, 128
    %1249 = vxpose.xlu0.b32.cont [14/16] 0.0, 128
    %1250 = vxpose.xlu0.b32.cont [15/16] 0.0, 128
    %1251 = vxpose.xlu0.b32.end [16/16] 0.0, 128
    %v1252 = vpop.trf.xlu0
    %v1253 = vpop.trf.xlu0
    %v1254 = vpop.trf.xlu0
    %v1255 = vpop.trf.xlu0
    %v1256 = vpop.trf.xlu0
    %v1257 = vpop.trf.xlu0
    %v1258 = vpop.trf.xlu0
    %v1259 = vpop.trf.xlu0
    %v1260 = vpop.trf.xlu0
    %v1261 = vpop.trf.xlu0
    %v1262 = vpop.trf.xlu0
    %v1263 = vpop.trf.xlu0
    %v1264 = vpop.trf.xlu0
    %v1265 = vpop.trf.xlu0
    %v1266 = vpop.trf.xlu0
    %v1267 = vpop.trf.xlu0
    %v1268 = vpack.c.bf16 %v1252, %v1252
    %1269 = vrot.lane.b32.xlu0 %v821, 104
    %v1270 = vpop.permute.xlu0 %1269
    %v1272 = vsel %vm225, %v1270, 0
    %v1275 = vsel %vm229, %v1268, 0
    %1277 = vmatprep.subr.bf16.mxu0 0
    %1278 = vmatpush1.bf16.msra.mxu0 0
    %1279 = vmatprep.subr.bf16.mxu0 0
    %1280 = vmatpush1.bf16.msra.mxu0 0
    %1281 = vmatprep.subr.bf16.mxu0 0
    %1282 = vmatpush1.bf16.msra.mxu0 0
    %1283 = vmatprep.subr.bf16.mxu0 0
    %1284 = vmatpush1.bf16.msra.mxu0 0
    %1285 = vmatprep.subr.bf16.mxu0 0
    %1286 = vmatpush1.bf16.msra.mxu0 0
    %1287 = vmatprep.subr.bf16.mxu0 0
    %1288 = vmatpush1.bf16.msra.mxu0 0
    %1289 = vmatprep.subr.bf16.mxu0 0
    %1290 = vmatpush1.bf16.msra.mxu0 0
    %1291 = vmatprep.subr.bf16.mxu0 0
    %1292 = vmatpush1.bf16.msra.mxu0 %v1275
    %1293 = vmatprep.subr.bf16.mxu0 0
    %1294 = vmatpush2.bf16.msra.mxu0 0
    %1295 = vmatprep.subr.bf16.mxu0 0
    %1296 = vmatpush2.bf16.msra.mxu0 0
    %1297 = vmatprep.subr.bf16.mxu0 0
    %1298 = vmatpush2.bf16.msra.mxu0 0
    %1299 = vmatprep.subr.bf16.mxu0 0
    %1300 = vmatpush2.bf16.msra.mxu0 0
    %1301 = vmatprep.subr.bf16.mxu0 0
    %1302 = vmatpush2.bf16.msra.mxu0 0
    %1303 = vmatprep.subr.bf16.mxu0 0
    %1304 = vmatpush2.bf16.msra.mxu0 0
    %1305 = vmatprep.subr.bf16.mxu0 0
    %1306 = vmatpush2.bf16.msra.mxu0 0
    %1307 = vmatprep.subr.bf16.mxu0 0
    %1308 = vmatpush2.bf16.msra.mxu0 0
    %1309 = vmatprep.mubr.bf16.mxu0 0
    %1310 = vmatmul.mubr.bf16.gmra.mxu0 %v1272
    %v1311 = vpop.f32.mrf.mxu0
    %v1312 = vadd.f32 %v826, %v1311
    %v1313 = vpop.f32.mrf.mxu0
    %v1314 = vpop.f32.mrf.mxu0
    %v1315 = vpop.f32.mrf.mxu0
    %1316 = vdwg.mxu0
    %v1317 = vsel %vm225, %v1312, -inf
    %1318 = vmax.xlane.f32.xlu0 %v1317
    %v1319 = vpop.xlane.xlu0 %1318
    %v1320 = vsub.f32 %v1312, %v1319
    %v1321 = vmul.f32 %v1320, 1.442695
    %v1322 = vpow.pop %v1321
    %v1323 = vsel %vm225, %v1322, 0.0
    %1324 = vadd.xlane.f32.xlu0 %v1323
    %v1325 = vpop.xlane.xlu0 %1324
    %v1326 = vrcp.pop %v1325
    %v1327 = vmul.f32 %v1322, %v1326
    %v1328 = vpack.c.bf16 %v1327, %v1327
    %1329 = vrot.lane.b32.xlu0 %v821, 40
    %v1330 = vpop.permute.xlu0 %1329
    %v1332 = vsel %vm225, %v1328, 0
    %v1335 = vsel %vm229, %v1330, 0
    %1337 = vmatprep.subr.bf16.mxu0 0
    %1338 = vmatpush1.bf16.msra.mxu0 0
    %1339 = vmatprep.subr.bf16.mxu0 0
    %1340 = vmatpush1.bf16.msra.mxu0 0
    %1341 = vmatprep.subr.bf16.mxu0 0
    %1342 = vmatpush1.bf16.msra.mxu0 0
    %1343 = vmatprep.subr.bf16.mxu0 0
    %1344 = vmatpush1.bf16.msra.mxu0 0
    %1345 = vmatprep.subr.bf16.mxu0 0
    %1346 = vmatpush1.bf16.msra.mxu0 0
    %1347 = vmatprep.subr.bf16.mxu0 0
    %1348 = vmatpush1.bf16.msra.mxu0 0
    %1349 = vmatprep.subr.bf16.mxu0 0
    %1350 = vmatpush1.bf16.msra.mxu0 0
    %1351 = vmatprep.subr.bf16.mxu0 0
    %1352 = vmatpush1.bf16.msra.mxu0 %v1335
    %1353 = vmatprep.subr.bf16.mxu0 0
    %1354 = vmatpush2.bf16.msra.mxu0 0
    %1355 = vmatprep.subr.bf16.mxu0 0
    %1356 = vmatpush2.bf16.msra.mxu0 0
    %1357 = vmatprep.subr.bf16.mxu0 0
    %1358 = vmatpush2.bf16.msra.mxu0 0
    %1359 = vmatprep.subr.bf16.mxu0 0
    %1360 = vmatpush2.bf16.msra.mxu0 0
    %1361 = vmatprep.subr.bf16.mxu0 0
    %1362 = vmatpush2.bf16.msra.mxu0 0
    %1363 = vmatprep.subr.bf16.mxu0 0
    %1364 = vmatpush2.bf16.msra.mxu0 0
    %1365 = vmatprep.subr.bf16.mxu0 0
    %1366 = vmatpush2.bf16.msra.mxu0 0
    %1367 = vmatprep.subr.bf16.mxu0 0
    %1368 = vmatpush2.bf16.msra.mxu0 0
    %1369 = vmatprep.mubr.bf16.mxu0 0
    %1370 = vmatmul.mubr.bf16.gmra.mxu0 %v1332
    %v1371 = vpop.f32.mrf.mxu0
    %v1372 = vadd.f32 0.0, %v1371
    %v1373 = vpop.f32.mrf.mxu0
    %v1374 = vpop.f32.mrf.mxu0
    %v1375 = vpop.f32.mrf.mxu0
    %1376 = vdwg.mxu0
    %1378 = vrot.lane.b32.xlu0 %v1372, 24
    %v1379 = vpop.permute.xlu0 %1378
    %1381 = vst.msk [vmem:[#allocation2 + $0x8] sm:$0xff] %vm783, %v1379
    %v1382 = vld [vmem:[#allocation2] sm:$0xff]
    %v1383 = vld [vmem:[#allocation2 + $0x8] sm:$0xff]
    %v1384 = vld [vmem:[%s4] sm:$0xff]
    %v1385 = vld [vmem:[%s4 + $0x8] sm:$0xff]
    %v1386 = vld [vmem:[%s4 + $0x10] sm:$0xff]
    %v1387 = vld [vmem:[%s4 + $0x18] sm:$0xff]
    %v1388 = vpack.c.bf16 %v1383, %v1382
    %v1389 = vpack.c.bf16 %v1385, %v1384
    %v1390 = vpack.c.bf16 %v1387, %v1386
    %v1391 = vld [vmem:[#allocation8] sm:$0x1]
    %v1393 = vlaneseq
    %v1394 = vshrl.u32 %v1393, 7
    %v1395 = vsub.s32 0, %v1394
    %v1396 = vrot.slane %v1391, %v1395
    %v1399 = vsel %vm84, %v1388, 0
    %1401 = vmatprep.subr.bf16.mxu0 0
    %1402 = vmatpush1.bf16.msra.mxu0 0
    %1403 = vmatprep.subr.bf16.mxu0 0
    %1404 = vmatpush1.bf16.msra.mxu0 0
    %1405 = vmatprep.subr.bf16.mxu0 0
    %1406 = vmatpush1.bf16.msra.mxu0 0
    %1407 = vmatprep.subr.bf16.mxu0 0
    %1408 = vmatpush1.bf16.msra.mxu0 0
    %1409 = vmatprep.subr.bf16.mxu0 0
    %1410 = vmatpush1.bf16.msra.mxu0 0
    %1411 = vmatprep.subr.bf16.mxu0 0
    %1412 = vmatpush1.bf16.msra.mxu0 0
    %1413 = vmatprep.subr.bf16.mxu0 0
    %1414 = vmatpush1.bf16.msra.mxu0 %v1390
    %1415 = vmatprep.subr.bf16.mxu0 0
    %1416 = vmatpush1.bf16.msra.mxu0 %v1389
    %1417 = vmatprep.subr.bf16.mxu0 0
    %1418 = vmatpush2.bf16.msra.mxu0 0
    %1419 = vmatprep.subr.bf16.mxu0 0
    %1420 = vmatpush2.bf16.msra.mxu0 0
    %1421 = vmatprep.subr.bf16.mxu0 0
    %1422 = vmatpush2.bf16.msra.mxu0 0
    %1423 = vmatprep.subr.bf16.mxu0 0
    %1424 = vmatpush2.bf16.msra.mxu0 0
    %1425 = vmatprep.subr.bf16.mxu0 0
    %1426 = vmatpush2.bf16.msra.mxu0 0
    %1427 = vmatprep.subr.bf16.mxu0 0
    %1428 = vmatpush2.bf16.msra.mxu0 0
    %1429 = vmatprep.subr.bf16.mxu0 0
    %1430 = vmatpush2.bf16.msra.mxu0 0
    %1431 = vmatprep.subr.bf16.mxu0 0
    %1432 = vmatpush2.bf16.msra.mxu0 0
    %1433 = vmatprep.mubr.bf16.mxu0 0
    %1434 = vmatmul.mubr.bf16.gmra.mxu0 %v1399
    %v1435 = vpop.f32.mrf.mxu0
    %v1436 = vadd.f32 %v1396, %v1435
    %v1437 = vpop.f32.mrf.mxu0
    %v1438 = vpop.f32.mrf.mxu0
    %v1439 = vadd.f32 %v1396, %v1438
    %v1440 = vpop.f32.mrf.mxu0
    %1441 = vdwg.mxu0
    %v1442 = vadd.f32 %v1436, %v122
    %v1443 = vadd.f32 %v1439, %v123
    %v1444 = vld [vmem:[%s10 + $0x1] sm:$0x1]
    %v1445 = vld [vmem:[%s11 + $0x1] sm:$0x1]
    %v1446 = vsel %vm84, %v1442, 0.0
    %1447 = vadd.xlane.f32.xlu0 %v1446
    %v1448 = vpop.xlane.xlu0 %1447
    %v1449 = vsel %vm84, %v1443, 0.0
    %1450 = vadd.xlane.f32.xlu0 %v1449
    %v1451 = vpop.xlane.xlu0 %1450
    %v1452 = vmul.f32 %v1448, %v91
    %v1453 = vmul.f32 %v1451, %v91
    %v1454 = vsub.f32 %v1442, %v1452
    %v1455 = vsub.f32 %v1443, %v1453
    %v1456 = vmul.f32 %v1454, %v1454
    %v1457 = vmul.f32 %v1455, %v1455
    %v1458 = vsel %vm84, %v1456, 0.0
    %1459 = vadd.xlane.f32.xlu0 %v1458
    %v1460 = vpop.xlane.xlu0 %1459
    %v1461 = vsel %vm84, %v1457, 0.0
    %1462 = vadd.xlane.f32.xlu0 %v1461
    %v1463 = vpop.xlane.xlu0 %1462
    %v1464 = vmul.f32 %v1460, %v91
    %v1465 = vmul.f32 %v1463, %v91
    %v1466 = vadd.f32 %v1464, 1e-12
    %v1467 = vadd.f32 %v1465, 1e-12
    %v1468 = vrsqrt.pop %v1466
    %v1469 = vrsqrt.pop %v1467
    %v1470 = vmul.f32 %v1454, %v1468
    %v1471 = vmul.f32 %v1455, %v1469
    %v1472 = vlaneseq
    %v1473 = vshrl.u32 %v1472, 7
    %v1474 = vsub.s32 0, %v1473
    %v1475 = vrot.slane %v1444, %v1474
    %v1476 = vmul.f32 %v1470, %v1475
    %v1477 = vmul.f32 %v1471, %v1475
    %v1478 = vlaneseq
    %v1479 = vshrl.u32 %v1478, 7
    %v1480 = vsub.s32 0, %v1479
    %v1481 = vrot.slane %v1445, %v1480
    %v1482 = vadd.f32 %v1476, %v1481
    %v1483 = vadd.f32 %v1477, %v1481
    %v1484 = vld [vmem:[%s6] sm:$0xff]
    %v1485 = vld [vmem:[%s6 + $0x8] sm:$0xff]
    %v1486 = vld [vmem:[%s6 + $0x10] sm:$0xff]
    %v1487 = vld [vmem:[%s6 + $0x18] sm:$0xff]
    %v1488 = vpack.c.bf16 %v1483, %v1482
    %v1489 = vpack.c.bf16 %v1485, %v1484
    %v1490 = vpack.c.bf16 %v1487, %v1486
    %v1491 = vld [vmem:[%s7] sm:$0x1]
    %v1493 = vlaneseq
    %v1494 = vshrl.u32 %v1493, 7
    %v1495 = vsub.s32 0, %v1494
    %v1496 = vrot.slane %v1491, %v1495
    %v1499 = vsel %vm84, %v1488, 0
    %1501 = vmatprep.subr.bf16.mxu0 0
    %1502 = vmatpush1.bf16.msra.mxu0 0
    %1503 = vmatprep.subr.bf16.mxu0 0
    %1504 = vmatpush1.bf16.msra.mxu0 0
    %1505 = vmatprep.subr.bf16.mxu0 0
    %1506 = vmatpush1.bf16.msra.mxu0 0
    %1507 = vmatprep.subr.bf16.mxu0 0
    %1508 = vmatpush1.bf16.msra.mxu0 0
    %1509 = vmatprep.subr.bf16.mxu0 0
    %1510 = vmatpush1.bf16.msra.mxu0 0
    %1511 = vmatprep.subr.bf16.mxu0 0
    %1512 = vmatpush1.bf16.msra.mxu0 0
    %1513 = vmatprep.subr.bf16.mxu0 0
    %1514 = vmatpush1.bf16.msra.mxu0 %v1490
    %1515 = vmatprep.subr.bf16.mxu0 0
    %1516 = vmatpush1.bf16.msra.mxu0 %v1489
    %1517 = vmatprep.subr.bf16.mxu0 0
    %1518 = vmatpush2.bf16.msra.mxu0 0
    %1519 = vmatprep.subr.bf16.mxu0 0
    %1520 = vmatpush2.bf16.msra.mxu0 0
    %1521 = vmatprep.subr.bf16.mxu0 0
    %1522 = vmatpush2.bf16.msra.mxu0 0
    %1523 = vmatprep.subr.bf16.mxu0 0
    %1524 = vmatpush2.bf16.msra.mxu0 0
    %1525 = vmatprep.subr.bf16.mxu0 0
    %1526 = vmatpush2.bf16.msra.mxu0 0
    %1527 = vmatprep.subr.bf16.mxu0 0
    %1528 = vmatpush2.bf16.msra.mxu0 0
    %1529 = vmatprep.subr.bf16.mxu0 0
    %1530 = vmatpush2.bf16.msra.mxu0 0
    %1531 = vmatprep.subr.bf16.mxu0 0
    %1532 = vmatpush2.bf16.msra.mxu0 0
    %1533 = vmatprep.mubr.bf16.mxu0 0
    %1534 = vmatmul.mubr.bf16.gmra.mxu0 %v1499
    %v1535 = vpop.f32.mrf.mxu0
    %v1536 = vadd.f32 %v1496, %v1535
    %v1537 = vpop.f32.mrf.mxu0
    %v1538 = vpop.f32.mrf.mxu0
    %v1539 = vadd.f32 %v1496, %v1538
    %v1540 = vpop.f32.mrf.mxu0
    %1541 = vdwg.mxu0
    %v1542 = vmul.f32 %v1536, %v1536
    %v1543 = vmul.f32 %v1539, %v1539
    %v1544 = vmul.f32 %v1536, %v1542
    %v1545 = vmul.f32 %v1539, %v1543
    %v1546 = vmul.f32 %v1544, 0.044715
    %v1547 = vmul.f32 %v1545, 0.044715
    %v1548 = vadd.f32 %v1536, %v1546
    %v1549 = vadd.f32 %v1539, %v1547
    %v1550 = vmul.f32 %v1548, 0.7978846
    %v1551 = vmul.f32 %v1549, 0.7978846
    %v1552 = vtanh.pop %v1550
    %v1553 = vtanh.pop %v1551
    %v1554 = vadd.f32 %v1552, 1.0
    %v1555 = vadd.f32 %v1553, 1.0
    %v1556 = vmul.f32 %v1554, 0.5
    %v1557 = vmul.f32 %v1555, 0.5
    %v1558 = vmul.f32 %v1536, %v1556
    %v1559 = vmul.f32 %v1539, %v1557
    %v1560 = vld [vmem:[%s8] sm:$0xff]
    %v1561 = vld [vmem:[%s8 + $0x8] sm:$0xff]
    %v1562 = vld [vmem:[%s8 + $0x10] sm:$0xff]
    %v1563 = vld [vmem:[%s8 + $0x18] sm:$0xff]
    %v1564 = vld [vmem:[%s8 + $0x20] sm:$0xff]
    %v1565 = vld [vmem:[%s8 + $0x28] sm:$0xff]
    %v1566 = vld [vmem:[%s8 + $0x30] sm:$0xff]
    %v1567 = vld [vmem:[%s8 + $0x38] sm:$0xff]
    %v1568 = vpack.c.bf16 %v1559, %v1558
    %v1569 = vpack.c.bf16 %v1561, %v1560
    %v1570 = vpack.c.bf16 %v1563, %v1562
    %v1571 = vpack.c.bf16 %v1565, %v1564
    %v1572 = vpack.c.bf16 %v1567, %v1566
    %v1573 = vld [vmem:[%s9] sm:$0x1]
    %v1575 = vlaneseq
    %v1576 = vshrl.u32 %v1575, 7
    %v1577 = vsub.s32 0, %v1576
    %v1578 = vrot.slane %v1573, %v1577
    %vm1580 = vcmask 523264
    %v1582 = vsel %vm1580, %v1568, 0
    %1584 = vmatprep.subr.bf16.mxu0 0
    %1585 = vmatpush1.bf16.msra.mxu0 0
    %1586 = vmatprep.subr.bf16.mxu0 0
    %1587 = vmatpush1.bf16.msra.mxu0 0
    %1588 = vmatprep.subr.bf16.mxu0 0
    %1589 = vmatpush1.bf16.msra.mxu0 0
    %1590 = vmatprep.subr.bf16.mxu0 0
    %1591 = vmatpush1.bf16.msra.mxu0 0
    %1592 = vmatprep.subr.bf16.mxu0 0
    %1593 = vmatpush1.bf16.msra.mxu0 %v1572
    %1594 = vmatprep.subr.bf16.mxu0 0
    %1595 = vmatpush1.bf16.msra.mxu0 %v1571
    %1596 = vmatprep.subr.bf16.mxu0 0
    %1597 = vmatpush1.bf16.msra.mxu0 %v1570
    %1598 = vmatprep.subr.bf16.mxu0 0
    %1599 = vmatpush1.bf16.msra.mxu0 %v1569
    %1600 = vmatprep.subr.bf16.mxu0 0
    %1601 = vmatpush2.bf16.msra.mxu0 0
    %1602 = vmatprep.subr.bf16.mxu0 0
    %1603 = vmatpush2.bf16.msra.mxu0 0
    %1604 = vmatprep.subr.bf16.mxu0 0
    %1605 = vmatpush2.bf16.msra.mxu0 0
    %1606 = vmatprep.subr.bf16.mxu0 0
    %1607 = vmatpush2.bf16.msra.mxu0 0
    %1608 = vmatprep.subr.bf16.mxu0 0
    %1609 = vmatpush2.bf16.msra.mxu0 0
    %1610 = vmatprep.subr.bf16.mxu0 0
    %1611 = vmatpush2.bf16.msra.mxu0 0
    %1612 = vmatprep.subr.bf16.mxu0 0
    %1613 = vmatpush2.bf16.msra.mxu0 0
    %1614 = vmatprep.subr.bf16.mxu0 0
    %1615 = vmatpush2.bf16.msra.mxu0 0
    %1616 = vmatprep.mubr.bf16.mxu0 0
    %1617 = vmatmul.mubr.bf16.gmra.mxu0 %v1582
    %v1618 = vpop.f32.mrf.mxu0
    %v1619 = vadd.f32 %v1578, %v1618
    %v1620 = vpop.f32.mrf.mxu0
    %v1621 = vpop.f32.mrf.mxu0
    %v1622 = vadd.f32 %v1578, %v1621
    %v1623 = vpop.f32.mrf.mxu0
    %1624 = vdwg.mxu0
    %v1625 = vadd.f32 %v1619, %v1482
    %v1626 = vadd.f32 %v1622, %v1483
    %v1627 = vld [vmem:[%s10 + $0x2] sm:$0x1]
    %v1628 = vld [vmem:[%s11 + $0x2] sm:$0x1]
    %v1629 = vsel %vm84, %v1625, 0.0
    %1630 = vadd.xlane.f32.xlu0 %v1629
    %v1631 = vpop.xlane.xlu0 %1630
    %v1632 = vsel %vm84, %v1626, 0.0
    %1633 = vadd.xlane.f32.xlu0 %v1632
    %v1634 = vpop.xlane.xlu0 %1633
    %v1635 = vmul.f32 %v1631, %v91
    %v1636 = vmul.f32 %v1634, %v91
    %v1637 = vsub.f32 %v1625, %v1635
    %v1638 = vsub.f32 %v1626, %v1636
    %v1639 = vmul.f32 %v1637, %v1637
    %v1640 = vmul.f32 %v1638, %v1638
    %v1641 = vsel %vm84, %v1639, 0.0
    %1642 = vadd.xlane.f32.xlu0 %v1641
    %v1643 = vpop.xlane.xlu0 %1642
    %v1644 = vsel %vm84, %v1640, 0.0
    %1645 = vadd.xlane.f32.xlu0 %v1644
    %v1646 = vpop.xlane.xlu0 %1645
    %v1647 = vmul.f32 %v1643, %v91
    %v1648 = vmul.f32 %v1646, %v91
    %v1649 = vadd.f32 %v1647, 1e-12
    %v1650 = vadd.f32 %v1648, 1e-12
    %v1651 = vrsqrt.pop %v1649
    %v1652 = vrsqrt.pop %v1650
    %v1653 = vmul.f32 %v1637, %v1651
    %v1654 = vmul.f32 %v1638, %v1652
    %v1655 = vlaneseq
    %v1656 = vshrl.u32 %v1655, 7
    %v1657 = vsub.s32 0, %v1656
    %v1658 = vrot.slane %v1627, %v1657
    %v1659 = vmul.f32 %v1653, %v1658
    %v1660 = vmul.f32 %v1654, %v1658
    %v1661 = vlaneseq
    %v1662 = vshrl.u32 %v1661, 7
    %v1663 = vsub.s32 0, %v1662
    %v1664 = vrot.slane %v1628, %v1663
    %v1665 = vadd.f32 %v1659, %v1664
    %v1666 = vadd.f32 %v1660, %v1664
    %1667 = vst.msk [vmem:[#allocation9] sm:$0xff] %vm84, %v1665
    %1668 = vst.msk [vmem:[#allocation9 + $0x8] sm:$0xff] %vm84, %v1666
    // Predicated region
    $region62: #{tpu_custom_call.1} parent=1 // pred_check
      _
    $region63: #{tpu_custom_call.1} parent=1 // pred_check_branch
      %1670 = sbr.rel (0) target = $region65
    $region64: #{tpu_custom_call.1} parent=1 // pred_region
      %s1672 = ssub.s32 256, 256
      %1673 = vsyncadd [#allocation5], %s1672
      %s1674 = sshll.u32 [#allocation9], 4
      %s1675 = int_to_ptr.vmem [resolvable:$true] %s1674
      %1680 = dma.vmem_to_hbm [thread:$0]  %s1675, 256, %s12, [#allocation5], 128, 128, 8
    $region65: #{tpu_custom_call.1} parent=1 // pred_fallthru
      _
    // Predicated region
    $region66: #{tpu_custom_call.1} parent=1 // pred_check
      _
    $region67: #{tpu_custom_call.1} parent=1 // pred_check_branch
      %1682 = sbr.rel (0) target = $region69
    $region68: #{tpu_custom_call.1} parent=1 // pred_region
      %1683 = dma.done [#allocation5], 256
    $region69: #{tpu_custom_call.1} parent=1 // pred_fallthru
      _
    %1684 = vsyncpa [#allocation4], 1
    %1685 = vsyncpa [#allocation7], 1
    %1686 = vsyncpa [#allocation5], 1

</llo_original>
